<compile_context>
chip_gen: v5e
topology: v5e:2x2
jax: 0.10.0
libtpu: 0.0.40
codegen_flags: <defaults>
</compile_context>

<pallas_src>
import numpy as np
import jax
import jax.numpy as jnp
from jax.experimental import pallas as pl
from jax.experimental.pallas import tpu as pltpu


# ------------------------- fused Pallas kernel -------------------------

def _mnist_cnn_kernel(x_ref, w1_ref, b1_ref, w2_ref, b2_ref, w3_ref, b3_ref,
                      pool_ref, o_ref, s2_ref, s3_ref):
    tb = o_ref.shape[0]  # batch tile (multiple of 8)

    def conv_relu(src_ref, h_out, w_ref, b_ref):
        # src_ref: (rows, tb, K) zero-padded activation rows; row p = 2*i + dy.
        # w_ref:   (3, K, N) banded weight matrices (one per kernel row dy).
        # returns relu(conv) of shape (h_out*tb, N); row = i*tb + b, lane = j_out*C_out + c.
        acc = None
        for dy in range(3):
            lhs = jnp.concatenate([src_ref[2 * i + dy] for i in range(h_out)], axis=0)
            part = jnp.dot(lhs, w_ref[dy], preferred_element_type=jnp.float32)
            acc = part if acc is None else acc + part
        return jnp.maximum(acc + b_ref[...], 0.0)

    # conv1: x_ref (29, tb, 28) -> a1 (14*tb, 224); lane = j1*16 + c
    a1 = conv_relu(x_ref, 14, w1_ref, b1_ref)
    # stage into padded scratch for conv2 (row 0 = zero pad, rows 1..14 = data)
    s2_ref[0] = jnp.zeros((tb, 224), jnp.float32)
    for r in range(14):
        s2_ref[r + 1] = a1[r * tb:(r + 1) * tb, :]

    # conv2: s2 (15, tb, 224) -> a2 (7*tb, 112); lane = j2*16 + c
    a2 = conv_relu(s2_ref, 7, w2_ref, b2_ref)
    s3_ref[0] = jnp.zeros((tb, 112), jnp.float32)   # top zero pad
    s3_ref[8] = jnp.zeros((tb, 112), jnp.float32)   # bottom zero pad
    for r in range(7):
        s3_ref[r + 1] = a2[r * tb:(r + 1) * tb, :]

    # conv3: s3 (9, tb, 112) -> a3 (4*tb, 40); lane = j3*10 + c
    a3 = conv_relu(s3_ref, 4, w3_ref, b3_ref)

    # fused global 4x4 average pool: sum over output rows i3, then a (40,10) pooling
    # matmul that sums over j3 and applies the 1/16 scale.
    psum = (a3[0:tb, :] + a3[tb:2 * tb, :] + a3[2 * tb:3 * tb, :] + a3[3 * tb:4 * tb, :])
    o_ref[...] = jnp.dot(psum, pool_ref[...],
                         preferred_element_type=jnp.float32).astype(o_ref.dtype)


# ------------------------- parameter lowering (glue) -------------------------

def _round_up(x, m):
    return (x + m - 1) // m * m


def _band_weights(w_torch, w_in, w_out):
    """PyTorch conv weight (C_out, C_in, 3, 3) -> banded matrices (3, w_in*C_in, w_out*C_out).

    band[dy, w*C_in + ci, j*C_out + co] = w_torch[co, ci, dy, w - 2*j + 1] when the tap is
    in range, else 0 (this folds the stride-2 selection and the width zero-padding of a
    3x3/stride-2/pad-1 conv into the matmul).
    """
    c_out, c_in = w_torch.shape[0], w_torch.shape[1]
    sel = np.zeros((w_in, w_out, 3), np.float32)
    for j in range(w_out):
        for dx in range(3):
            wi = 2 * j + dx - 1
            if 0 <= wi < w_in:
                sel[wi, j, dx] = 1.0
    band = jnp.einsum('wjd,ocyd->ywcjo', jnp.asarray(sel), w_torch.astype(jnp.float32))
    return band.reshape(3, w_in * c_in, w_out * c_out)


# ------------------------- model -------------------------

def init_params(key):
    def conv_init(k, c_out, c_in):
        k_w, k_b = jax.random.split(k)
        fan_in = c_in * 9
        bound = 1.0 / jnp.sqrt(fan_in)
        w = jax.random.uniform(k_w, (c_out, c_in, 3, 3), jnp.float32, -bound, bound)
        b = jax.random.uniform(k_b, (c_out,), jnp.float32, -bound, bound)
        return w, b

    k1, k2, k3 = jax.random.split(key, 3)
    w1, b1 = conv_init(k1, 16, 1)
    w2, b2 = conv_init(k2, 16, 16)
    w3, b3 = conv_init(k3, 10, 16)
    return dict(w1=w1, b1=b1, w2=w2, b2=b2, w3=w3, b3=b3)


def mnist_cnn_forward(xb, params, *, tile_b=64):
    # xb.view(-1, 1, 28, 28)
    x = jnp.asarray(xb, jnp.float32).reshape(-1, 28, 28)
    b = x.shape[0]
    tb = _round_up(min(tile_b, _round_up(b, 8)), 8)
    b_pad = _round_up(b, tb)

    # (B,28,28) -> (H, B, W); add one zero row at the top (H padding) and pad batch.
    x_t = jnp.transpose(x, (1, 0, 2))
    x_t = jnp.pad(x_t, ((1, 0), (0, b_pad - b), (0, 0)))            # (29, b_pad, 28)

    w1 = _band_weights(params["w1"], 28, 14)                        # (3,  28, 224)
    w2 = _band_weights(params["w2"], 14, 7)                         # (3, 224, 112)
    w3 = _band_weights(params["w3"], 7, 4)                          # (3, 112,  40)
    b1 = jnp.tile(params["b1"].astype(jnp.float32), 14).reshape(1, 224)
    b2 = jnp.tile(params["b2"].astype(jnp.float32), 7).reshape(1, 112)
    b3 = jnp.tile(params["b3"].astype(jnp.float32), 4).reshape(1, 40)
    pool = jnp.asarray(np.tile(np.eye(10, dtype=np.float32), (4, 1)) / 16.0)  # (40, 10)

    grid = (b_pad // tb,)
    out = pl.pallas_call(
        _mnist_cnn_kernel,
        out_shape=jax.ShapeDtypeStruct((b_pad, 10), jnp.float32),
        grid_spec=pltpu.PrefetchScalarGridSpec(
            num_scalar_prefetch=0,
            grid=grid,
            in_specs=[
                pl.BlockSpec((29, tb, 28), lambda i: (0, i, 0)),     # input batch tile
                pl.BlockSpec((3, 28, 224), lambda i: (0, 0, 0)),     # resident weights
                pl.BlockSpec((1, 224), lambda i: (0, 0)),
                pl.BlockSpec((3, 224, 112), lambda i: (0, 0, 0)),
                pl.BlockSpec((1, 112), lambda i: (0, 0)),
                pl.BlockSpec((3, 112, 40), lambda i: (0, 0, 0)),
                pl.BlockSpec((1, 40), lambda i: (0, 0)),
                pl.BlockSpec((40, 10), lambda i: (0, 0)),
            ],
            out_specs=pl.BlockSpec((tb, 10), lambda i: (i, 0)),
            scratch_shapes=[
                pltpu.VMEM((15, tb, 224), jnp.float32),              # padded conv1 output
                pltpu.VMEM((9, tb, 112), jnp.float32),               # padded conv2 output
            ],
        ),
        compiler_params=pltpu.CompilerParams(
            dimension_semantics=("parallel",),
        ),
    )(x_t, w1, b1, w2, b2, w3, b3, pool)
    return out[:b]


# ------------------------- pure-JAX reference (for validation) -------------------------

def _reference_forward(xb, params):
    x = jnp.asarray(xb, jnp.float32).reshape(-1, 1, 28, 28)

    def conv(x, w, b):
        y = jax.lax.conv_general_dilated(
            x, w, window_strides=(2, 2), padding=((1, 1), (1, 1)),
            dimension_numbers=("NCHW", "OIHW", "NCHW"))
        return jax.nn.relu(y + b[None, :, None, None])

    x = conv(x, params["w1"], params["b1"])
    x = conv(x, params["w2"], params["b2"])
    x = conv(x, params["w3"], params["b3"])
    return jnp.mean(x, axis=(2, 3))                                  # avg_pool2d(4) + flatten


if __name__ == "__main__":
    key = jax.random.PRNGKey(0)
    k_p, k_x = jax.random.split(key)
    params = init_params(k_p)
    # small batch of flattened 28x28 "MNIST" images (forward does view(-1, 1, 28, 28))
    xb = jax.random.normal(k_x, (2, 784), dtype=jnp.float32)

    out = jax.jit(mnist_cnn_forward)(xb, params)
    out = jax.block_until_ready(out)
    assert out.shape == (2, 10) and out.dtype == jnp.float32

    ref = _reference_forward(xb, params)
    max_err = float(jnp.max(jnp.abs(out - ref)))
    assert max_err < 5e-3, f"mismatch vs reference: {max_err}"

    print("KERNEL_OK")
</pallas_src>

<mosaic_0001>
module attributes {stable_mosaic.version = 11 : i64} {
  func.func @_mnist_cnn_kernel(%arg0: i32, %arg1: memref<29x8x28xf32, #tpu.memory_space<vmem>>, %arg2: memref<3x28x224xf32, #tpu.memory_space<vmem>>, %arg3: memref<1x224xf32, #tpu.memory_space<vmem>>, %arg4: memref<3x224x112xf32, #tpu.memory_space<vmem>>, %arg5: memref<1x112xf32, #tpu.memory_space<vmem>>, %arg6: memref<3x112x40xf32, #tpu.memory_space<vmem>>, %arg7: memref<1x40xf32, #tpu.memory_space<vmem>>, %arg8: memref<40x10xf32, #tpu.memory_space<vmem>>, %arg9: memref<8x10xf32, #tpu.memory_space<vmem>>, %arg10: memref<15x8x224xf32, #tpu.memory_space<vmem>>, %arg11: memref<9x8x112xf32, #tpu.memory_space<vmem>>) attributes {dimension_semantics = [#tpu.dimension_semantics<parallel>], iteration_bounds = array<i64: 1>, scalar_prefetch = 0 : i64, scratch_operands = 2 : i64, tpu.core_type = #tpu.core_type<tc>, window_params = [{transform_indices = @transform_0, window_bounds = array<i64: 29, 8, 28>}, {pipeline_mode = #tpu.pipeline_mode<synchronous>, transform_indices = @transform_1, window_bounds = array<i64: 3, 28, 224>}, {pipeline_mode = #tpu.pipeline_mode<synchronous>, transform_indices = @transform_2, window_bounds = array<i64: 1, 224>}, {pipeline_mode = #tpu.pipeline_mode<synchronous>, transform_indices = @transform_3, window_bounds = array<i64: 3, 224, 112>}, {pipeline_mode = #tpu.pipeline_mode<synchronous>, transform_indices = @transform_4, window_bounds = array<i64: 1, 112>}, {pipeline_mode = #tpu.pipeline_mode<synchronous>, transform_indices = @transform_5, window_bounds = array<i64: 3, 112, 40>}, {pipeline_mode = #tpu.pipeline_mode<synchronous>, transform_indices = @transform_6, window_bounds = array<i64: 1, 40>}, {pipeline_mode = #tpu.pipeline_mode<synchronous>, transform_indices = @transform_7, window_bounds = array<i64: 40, 10>}, {transform_indices = @transform_8, window_bounds = array<i64: 8, 10>}]} {
    %c0 = arith.constant 0 : index
    %c0_0 = arith.constant 0 : index
    %c0_1 = arith.constant 0 : index
    %0 = vector.load %arg1[%c0, %c0_0, %c0_1] : memref<29x8x28xf32, #tpu.memory_space<vmem>>, vector<1x8x28xf32>
    %1 = vector.shape_cast %0 : vector<1x8x28xf32> to vector<8x28xf32>
    %c2 = arith.constant 2 : index
    %c0_2 = arith.constant 0 : index
    %c0_3 = arith.constant 0 : index
    %2 = vector.load %arg1[%c2, %c0_2, %c0_3] : memref<29x8x28xf32, #tpu.memory_space<vmem>>, vector<1x8x28xf32>
    %3 = vector.shape_cast %2 : vector<1x8x28xf32> to vector<8x28xf32>
    %c4 = arith.constant 4 : index
    %c0_4 = arith.constant 0 : index
    %c0_5 = arith.constant 0 : index
    %4 = vector.load %arg1[%c4, %c0_4, %c0_5] : memref<29x8x28xf32, #tpu.memory_space<vmem>>, vector<1x8x28xf32>
    %5 = vector.shape_cast %4 : vector<1x8x28xf32> to vector<8x28xf32>
    %c6 = arith.constant 6 : index
    %c0_6 = arith.constant 0 : index
    %c0_7 = arith.constant 0 : index
    %6 = vector.load %arg1[%c6, %c0_6, %c0_7] : memref<29x8x28xf32, #tpu.memory_space<vmem>>, vector<1x8x28xf32>
    %7 = vector.shape_cast %6 : vector<1x8x28xf32> to vector<8x28xf32>
    %c8 = arith.constant 8 : index
    %c0_8 = arith.constant 0 : index
    %c0_9 = arith.constant 0 : index
    %8 = vector.load %arg1[%c8, %c0_8, %c0_9] : memref<29x8x28xf32, #tpu.memory_space<vmem>>, vector<1x8x28xf32>
    %9 = vector.shape_cast %8 : vector<1x8x28xf32> to vector<8x28xf32>
    %c10 = arith.constant 10 : index
    %c0_10 = arith.constant 0 : index
    %c0_11 = arith.constant 0 : index
    %10 = vector.load %arg1[%c10, %c0_10, %c0_11] : memref<29x8x28xf32, #tpu.memory_space<vmem>>, vector<1x8x28xf32>
    %11 = vector.shape_cast %10 : vector<1x8x28xf32> to vector<8x28xf32>
    %c12 = arith.constant 12 : index
    %c0_12 = arith.constant 0 : index
    %c0_13 = arith.constant 0 : index
    %12 = vector.load %arg1[%c12, %c0_12, %c0_13] : memref<29x8x28xf32, #tpu.memory_space<vmem>>, vector<1x8x28xf32>
    %13 = vector.shape_cast %12 : vector<1x8x28xf32> to vector<8x28xf32>
    %c14 = arith.constant 14 : index
    %c0_14 = arith.constant 0 : index
    %c0_15 = arith.constant 0 : index
    %14 = vector.load %arg1[%c14, %c0_14, %c0_15] : memref<29x8x28xf32, #tpu.memory_space<vmem>>, vector<1x8x28xf32>
    %15 = vector.shape_cast %14 : vector<1x8x28xf32> to vector<8x28xf32>
    %c16 = arith.constant 16 : index
    %c0_16 = arith.constant 0 : index
    %c0_17 = arith.constant 0 : index
    %16 = vector.load %arg1[%c16, %c0_16, %c0_17] : memref<29x8x28xf32, #tpu.memory_space<vmem>>, vector<1x8x28xf32>
    %17 = vector.shape_cast %16 : vector<1x8x28xf32> to vector<8x28xf32>
    %c18 = arith.constant 18 : index
    %c0_18 = arith.constant 0 : index
    %c0_19 = arith.constant 0 : index
    %18 = vector.load %arg1[%c18, %c0_18, %c0_19] : memref<29x8x28xf32, #tpu.memory_space<vmem>>, vector<1x8x28xf32>
    %19 = vector.shape_cast %18 : vector<1x8x28xf32> to vector<8x28xf32>
    %c20 = arith.constant 20 : index
    %c0_20 = arith.constant 0 : index
    %c0_21 = arith.constant 0 : index
    %20 = vector.load %arg1[%c20, %c0_20, %c0_21] : memref<29x8x28xf32, #tpu.memory_space<vmem>>, vector<1x8x28xf32>
    %21 = vector.shape_cast %20 : vector<1x8x28xf32> to vector<8x28xf32>
    %c22 = arith.constant 22 : index
    %c0_22 = arith.constant 0 : index
    %c0_23 = arith.constant 0 : index
    %22 = vector.load %arg1[%c22, %c0_22, %c0_23] : memref<29x8x28xf32, #tpu.memory_space<vmem>>, vector<1x8x28xf32>
    %23 = vector.shape_cast %22 : vector<1x8x28xf32> to vector<8x28xf32>
    %c24 = arith.constant 24 : index
    %c0_24 = arith.constant 0 : index
    %c0_25 = arith.constant 0 : index
    %24 = vector.load %arg1[%c24, %c0_24, %c0_25] : memref<29x8x28xf32, #tpu.memory_space<vmem>>, vector<1x8x28xf32>
    %25 = vector.shape_cast %24 : vector<1x8x28xf32> to vector<8x28xf32>
    %c26 = arith.constant 26 : index
    %c0_26 = arith.constant 0 : index
    %c0_27 = arith.constant 0 : index
    %26 = vector.load %arg1[%c26, %c0_26, %c0_27] : memref<29x8x28xf32, #tpu.memory_space<vmem>>, vector<1x8x28xf32>
    %27 = vector.shape_cast %26 : vector<1x8x28xf32> to vector<8x28xf32>
    %28 = tpu.concatenate %1, %3, %5, %7, %9, %11, %13, %15, %17, %19, %21, %23, %25, %27 in 0 : vector<8x28xf32>, vector<8x28xf32>, vector<8x28xf32>, vector<8x28xf32>, vector<8x28xf32>, vector<8x28xf32>, vector<8x28xf32>, vector<8x28xf32>, vector<8x28xf32>, vector<8x28xf32>, vector<8x28xf32>, vector<8x28xf32>, vector<8x28xf32>, vector<8x28xf32> -> vector<112x28xf32>
    %c0_28 = arith.constant 0 : index
    %c0_29 = arith.constant 0 : index
    %c0_30 = arith.constant 0 : index
    %29 = vector.load %arg2[%c0_28, %c0_29, %c0_30] : memref<3x28x224xf32, #tpu.memory_space<vmem>>, vector<1x28x224xf32>
    %30 = vector.shape_cast %29 : vector<1x28x224xf32> to vector<28x224xf32>
    %cst = arith.constant dense<0.000000e+00> : vector<112x224xf32>
    %31 = tpu.matmul %28, %30, %cst {dimension_numbers = #tpu.dot_dimension_numbers<[1], [0], [0], [1], [0, 0, 1, 1], [], []>} : vector<112x28xf32>, vector<28x224xf32>, vector<112x224xf32> -> vector<112x224xf32>
    %c1 = arith.constant 1 : index
    %c0_31 = arith.constant 0 : index
    %c0_32 = arith.constant 0 : index
    %32 = vector.load %arg1[%c1, %c0_31, %c0_32] : memref<29x8x28xf32, #tpu.memory_space<vmem>>, vector<1x8x28xf32>
    %33 = vector.shape_cast %32 : vector<1x8x28xf32> to vector<8x28xf32>
    %c3 = arith.constant 3 : index
    %c0_33 = arith.constant 0 : index
    %c0_34 = arith.constant 0 : index
    %34 = vector.load %arg1[%c3, %c0_33, %c0_34] : memref<29x8x28xf32, #tpu.memory_space<vmem>>, vector<1x8x28xf32>
    %35 = vector.shape_cast %34 : vector<1x8x28xf32> to vector<8x28xf32>
    %c5 = arith.constant 5 : index
    %c0_35 = arith.constant 0 : index
    %c0_36 = arith.constant 0 : index
    %36 = vector.load %arg1[%c5, %c0_35, %c0_36] : memref<29x8x28xf32, #tpu.memory_space<vmem>>, vector<1x8x28xf32>
    %37 = vector.shape_cast %36 : vector<1x8x28xf32> to vector<8x28xf32>
    %c7 = arith.constant 7 : index
    %c0_37 = arith.constant 0 : index
    %c0_38 = arith.constant 0 : index
    %38 = vector.load %arg1[%c7, %c0_37, %c0_38] : memref<29x8x28xf32, #tpu.memory_space<vmem>>, vector<1x8x28xf32>
    %39 = vector.shape_cast %38 : vector<1x8x28xf32> to vector<8x28xf32>
    %c9 = arith.constant 9 : index
    %c0_39 = arith.constant 0 : index
    %c0_40 = arith.constant 0 : index
    %40 = vector.load %arg1[%c9, %c0_39, %c0_40] : memref<29x8x28xf32, #tpu.memory_space<vmem>>, vector<1x8x28xf32>
    %41 = vector.shape_cast %40 : vector<1x8x28xf32> to vector<8x28xf32>
    %c11 = arith.constant 11 : index
    %c0_41 = arith.constant 0 : index
    %c0_42 = arith.constant 0 : index
    %42 = vector.load %arg1[%c11, %c0_41, %c0_42] : memref<29x8x28xf32, #tpu.memory_space<vmem>>, vector<1x8x28xf32>
    %43 = vector.shape_cast %42 : vector<1x8x28xf32> to vector<8x28xf32>
    %c13 = arith.constant 13 : index
    %c0_43 = arith.constant 0 : index
    %c0_44 = arith.constant 0 : index
    %44 = vector.load %arg1[%c13, %c0_43, %c0_44] : memref<29x8x28xf32, #tpu.memory_space<vmem>>, vector<1x8x28xf32>
    %45 = vector.shape_cast %44 : vector<1x8x28xf32> to vector<8x28xf32>
    %c15 = arith.constant 15 : index
    %c0_45 = arith.constant 0 : index
    %c0_46 = arith.constant 0 : index
    %46 = vector.load %arg1[%c15, %c0_45, %c0_46] : memref<29x8x28xf32, #tpu.memory_space<vmem>>, vector<1x8x28xf32>
    %47 = vector.shape_cast %46 : vector<1x8x28xf32> to vector<8x28xf32>
    %c17 = arith.constant 17 : index
    %c0_47 = arith.constant 0 : index
    %c0_48 = arith.constant 0 : index
    %48 = vector.load %arg1[%c17, %c0_47, %c0_48] : memref<29x8x28xf32, #tpu.memory_space<vmem>>, vector<1x8x28xf32>
    %49 = vector.shape_cast %48 : vector<1x8x28xf32> to vector<8x28xf32>
    %c19 = arith.constant 19 : index
    %c0_49 = arith.constant 0 : index
    %c0_50 = arith.constant 0 : index
    %50 = vector.load %arg1[%c19, %c0_49, %c0_50] : memref<29x8x28xf32, #tpu.memory_space<vmem>>, vector<1x8x28xf32>
    %51 = vector.shape_cast %50 : vector<1x8x28xf32> to vector<8x28xf32>
    %c21 = arith.constant 21 : index
    %c0_51 = arith.constant 0 : index
    %c0_52 = arith.constant 0 : index
    %52 = vector.load %arg1[%c21, %c0_51, %c0_52] : memref<29x8x28xf32, #tpu.memory_space<vmem>>, vector<1x8x28xf32>
    %53 = vector.shape_cast %52 : vector<1x8x28xf32> to vector<8x28xf32>
    %c23 = arith.constant 23 : index
    %c0_53 = arith.constant 0 : index
    %c0_54 = arith.constant 0 : index
    %54 = vector.load %arg1[%c23, %c0_53, %c0_54] : memref<29x8x28xf32, #tpu.memory_space<vmem>>, vector<1x8x28xf32>
    %55 = vector.shape_cast %54 : vector<1x8x28xf32> to vector<8x28xf32>
    %c25 = arith.constant 25 : index
    %c0_55 = arith.constant 0 : index
    %c0_56 = arith.constant 0 : index
    %56 = vector.load %arg1[%c25, %c0_55, %c0_56] : memref<29x8x28xf32, #tpu.memory_space<vmem>>, vector<1x8x28xf32>
    %57 = vector.shape_cast %56 : vector<1x8x28xf32> to vector<8x28xf32>
    %c27 = arith.constant 27 : index
    %c0_57 = arith.constant 0 : index
    %c0_58 = arith.constant 0 : index
    %58 = vector.load %arg1[%c27, %c0_57, %c0_58] : memref<29x8x28xf32, #tpu.memory_space<vmem>>, vector<1x8x28xf32>
    %59 = vector.shape_cast %58 : vector<1x8x28xf32> to vector<8x28xf32>
    %60 = tpu.concatenate %33, %35, %37, %39, %41, %43, %45, %47, %49, %51, %53, %55, %57, %59 in 0 : vector<8x28xf32>, vector<8x28xf32>, vector<8x28xf32>, vector<8x28xf32>, vector<8x28xf32>, vector<8x28xf32>, vector<8x28xf32>, vector<8x28xf32>, vector<8x28xf32>, vector<8x28xf32>, vector<8x28xf32>, vector<8x28xf32>, vector<8x28xf32>, vector<8x28xf32> -> vector<112x28xf32>
    %c1_59 = arith.constant 1 : index
    %c0_60 = arith.constant 0 : index
    %c0_61 = arith.constant 0 : index
    %61 = vector.load %arg2[%c1_59, %c0_60, %c0_61] : memref<3x28x224xf32, #tpu.memory_space<vmem>>, vector<1x28x224xf32>
    %62 = vector.shape_cast %61 : vector<1x28x224xf32> to vector<28x224xf32>
    %cst_62 = arith.constant dense<0.000000e+00> : vector<112x224xf32>
    %63 = tpu.matmul %60, %62, %cst_62 {dimension_numbers = #tpu.dot_dimension_numbers<[1], [0], [0], [1], [0, 0, 1, 1], [], []>} : vector<112x28xf32>, vector<28x224xf32>, vector<112x224xf32> -> vector<112x224xf32>
    %64 = arith.addf %31, %63 : vector<112x224xf32>
    %c2_63 = arith.constant 2 : index
    %c0_64 = arith.constant 0 : index
    %c0_65 = arith.constant 0 : index
    %65 = vector.load %arg1[%c2_63, %c0_64, %c0_65] : memref<29x8x28xf32, #tpu.memory_space<vmem>>, vector<1x8x28xf32>
    %66 = vector.shape_cast %65 : vector<1x8x28xf32> to vector<8x28xf32>
    %c4_66 = arith.constant 4 : index
    %c0_67 = arith.constant 0 : index
    %c0_68 = arith.constant 0 : index
    %67 = vector.load %arg1[%c4_66, %c0_67, %c0_68] : memref<29x8x28xf32, #tpu.memory_space<vmem>>, vector<1x8x28xf32>
    %68 = vector.shape_cast %67 : vector<1x8x28xf32> to vector<8x28xf32>
    %c6_69 = arith.constant 6 : index
    %c0_70 = arith.constant 0 : index
    %c0_71 = arith.constant 0 : index
    %69 = vector.load %arg1[%c6_69, %c0_70, %c0_71] : memref<29x8x28xf32, #tpu.memory_space<vmem>>, vector<1x8x28xf32>
    %70 = vector.shape_cast %69 : vector<1x8x28xf32> to vector<8x28xf32>
    %c8_72 = arith.constant 8 : index
    %c0_73 = arith.constant 0 : index
    %c0_74 = arith.constant 0 : index
    %71 = vector.load %arg1[%c8_72, %c0_73, %c0_74] : memref<29x8x28xf32, #tpu.memory_space<vmem>>, vector<1x8x28xf32>
    %72 = vector.shape_cast %71 : vector<1x8x28xf32> to vector<8x28xf32>
    %c10_75 = arith.constant 10 : index
    %c0_76 = arith.constant 0 : index
    %c0_77 = arith.constant 0 : index
    %73 = vector.load %arg1[%c10_75, %c0_76, %c0_77] : memref<29x8x28xf32, #tpu.memory_space<vmem>>, vector<1x8x28xf32>
    %74 = vector.shape_cast %73 : vector<1x8x28xf32> to vector<8x28xf32>
    %c12_78 = arith.constant 12 : index
    %c0_79 = arith.constant 0 : index
    %c0_80 = arith.constant 0 : index
    %75 = vector.load %arg1[%c12_78, %c0_79, %c0_80] : memref<29x8x28xf32, #tpu.memory_space<vmem>>, vector<1x8x28xf32>
    %76 = vector.shape_cast %75 : vector<1x8x28xf32> to vector<8x28xf32>
    %c14_81 = arith.constant 14 : index
    %c0_82 = arith.constant 0 : index
    %c0_83 = arith.constant 0 : index
    %77 = vector.load %arg1[%c14_81, %c0_82, %c0_83] : memref<29x8x28xf32, #tpu.memory_space<vmem>>, vector<1x8x28xf32>
    %78 = vector.shape_cast %77 : vector<1x8x28xf32> to vector<8x28xf32>
    %c16_84 = arith.constant 16 : index
    %c0_85 = arith.constant 0 : index
    %c0_86 = arith.constant 0 : index
    %79 = vector.load %arg1[%c16_84, %c0_85, %c0_86] : memref<29x8x28xf32, #tpu.memory_space<vmem>>, vector<1x8x28xf32>
    %80 = vector.shape_cast %79 : vector<1x8x28xf32> to vector<8x28xf32>
    %c18_87 = arith.constant 18 : index
    %c0_88 = arith.constant 0 : index
    %c0_89 = arith.constant 0 : index
    %81 = vector.load %arg1[%c18_87, %c0_88, %c0_89] : memref<29x8x28xf32, #tpu.memory_space<vmem>>, vector<1x8x28xf32>
    %82 = vector.shape_cast %81 : vector<1x8x28xf32> to vector<8x28xf32>
    %c20_90 = arith.constant 20 : index
    %c0_91 = arith.constant 0 : index
    %c0_92 = arith.constant 0 : index
    %83 = vector.load %arg1[%c20_90, %c0_91, %c0_92] : memref<29x8x28xf32, #tpu.memory_space<vmem>>, vector<1x8x28xf32>
    %84 = vector.shape_cast %83 : vector<1x8x28xf32> to vector<8x28xf32>
    %c22_93 = arith.constant 22 : index
    %c0_94 = arith.constant 0 : index
    %c0_95 = arith.constant 0 : index
    %85 = vector.load %arg1[%c22_93, %c0_94, %c0_95] : memref<29x8x28xf32, #tpu.memory_space<vmem>>, vector<1x8x28xf32>
    %86 = vector.shape_cast %85 : vector<1x8x28xf32> to vector<8x28xf32>
    %c24_96 = arith.constant 24 : index
    %c0_97 = arith.constant 0 : index
    %c0_98 = arith.constant 0 : index
    %87 = vector.load %arg1[%c24_96, %c0_97, %c0_98] : memref<29x8x28xf32, #tpu.memory_space<vmem>>, vector<1x8x28xf32>
    %88 = vector.shape_cast %87 : vector<1x8x28xf32> to vector<8x28xf32>
    %c26_99 = arith.constant 26 : index
    %c0_100 = arith.constant 0 : index
    %c0_101 = arith.constant 0 : index
    %89 = vector.load %arg1[%c26_99, %c0_100, %c0_101] : memref<29x8x28xf32, #tpu.memory_space<vmem>>, vector<1x8x28xf32>
    %90 = vector.shape_cast %89 : vector<1x8x28xf32> to vector<8x28xf32>
    %c28 = arith.constant 28 : index
    %c0_102 = arith.constant 0 : index
    %c0_103 = arith.constant 0 : index
    %91 = vector.load %arg1[%c28, %c0_102, %c0_103] : memref<29x8x28xf32, #tpu.memory_space<vmem>>, vector<1x8x28xf32>
    %92 = vector.shape_cast %91 : vector<1x8x28xf32> to vector<8x28xf32>
    %93 = tpu.concatenate %66, %68, %70, %72, %74, %76, %78, %80, %82, %84, %86, %88, %90, %92 in 0 : vector<8x28xf32>, vector<8x28xf32>, vector<8x28xf32>, vector<8x28xf32>, vector<8x28xf32>, vector<8x28xf32>, vector<8x28xf32>, vector<8x28xf32>, vector<8x28xf32>, vector<8x28xf32>, vector<8x28xf32>, vector<8x28xf32>, vector<8x28xf32>, vector<8x28xf32> -> vector<112x28xf32>
    %c2_104 = arith.constant 2 : index
    %c0_105 = arith.constant 0 : index
    %c0_106 = arith.constant 0 : index
    %94 = vector.load %arg2[%c2_104, %c0_105, %c0_106] : memref<3x28x224xf32, #tpu.memory_space<vmem>>, vector<1x28x224xf32>
    %95 = vector.shape_cast %94 : vector<1x28x224xf32> to vector<28x224xf32>
    %cst_107 = arith.constant dense<0.000000e+00> : vector<112x224xf32>
    %96 = tpu.matmul %93, %95, %cst_107 {dimension_numbers = #tpu.dot_dimension_numbers<[1], [0], [0], [1], [0, 0, 1, 1], [], []>} : vector<112x28xf32>, vector<28x224xf32>, vector<112x224xf32> -> vector<112x224xf32>
    %97 = arith.addf %64, %96 : vector<112x224xf32>
    %c0_108 = arith.constant 0 : index
    %c0_109 = arith.constant 0 : index
    %98 = vector.load %arg3[%c0_108, %c0_109] : memref<1x224xf32, #tpu.memory_space<vmem>>, vector<1x224xf32>
    %99 = vector.broadcast %98 : vector<1x224xf32> to vector<112x224xf32>
    %100 = arith.addf %97, %99 : vector<112x224xf32>
    %cst_110 = arith.constant 0.000000e+00 : f32
    %101 = vector.broadcast %cst_110 : f32 to vector<112x224xf32>
    %102 = arith.maximumf %100, %101 : vector<112x224xf32>
    %cst_111 = arith.constant 0.000000e+00 : f32
    %103 = vector.broadcast %cst_111 : f32 to vector<8x224xf32>
    %c0_112 = arith.constant 0 : index
    %c0_113 = arith.constant 0 : index
    %c0_114 = arith.constant 0 : index
    %104 = vector.load %arg10[%c0_112, %c0_113, %c0_114] : memref<15x8x224xf32, #tpu.memory_space<vmem>>, vector<1x8x224xf32>
    %105 = vector.shape_cast %104 : vector<1x8x224xf32> to vector<8x224xf32>
    %106 = vector.shape_cast %103 : vector<8x224xf32> to vector<1x8x224xf32>
    tpu.vector_store %arg10[%c0_112, %c0_113, %c0_114], %106 {strides = array<i32>} : memref<15x8x224xf32, #tpu.memory_space<vmem>>, vector<1x8x224xf32>,
    %107 = vector.extract_strided_slice %102 {offsets = [0, 0], sizes = [8, 224], strides = [1, 1]} : vector<112x224xf32> to vector<8x224xf32>
    %c1_115 = arith.constant 1 : index
    %c0_116 = arith.constant 0 : index
    %c0_117 = arith.constant 0 : index
    %108 = vector.load %arg10[%c1_115, %c0_116, %c0_117] : memref<15x8x224xf32, #tpu.memory_space<vmem>>, vector<1x8x224xf32>
    %109 = vector.shape_cast %108 : vector<1x8x224xf32> to vector<8x224xf32>
    %110 = vector.shape_cast %107 : vector<8x224xf32> to vector<1x8x224xf32>
    tpu.vector_store %arg10[%c1_115, %c0_116, %c0_117], %110 {strides = array<i32>} : memref<15x8x224xf32, #tpu.memory_space<vmem>>, vector<1x8x224xf32>,
    %111 = vector.extract_strided_slice %102 {offsets = [8, 0], sizes = [8, 224], strides = [1, 1]} : vector<112x224xf32> to vector<8x224xf32>
    %c2_118 = arith.constant 2 : index
    %c0_119 = arith.constant 0 : index
    %c0_120 = arith.constant 0 : index
    %112 = vector.load %arg10[%c2_118, %c0_119, %c0_120] : memref<15x8x224xf32, #tpu.memory_space<vmem>>, vector<1x8x224xf32>
    %113 = vector.shape_cast %112 : vector<1x8x224xf32> to vector<8x224xf32>
    %114 = vector.shape_cast %111 : vector<8x224xf32> to vector<1x8x224xf32>
    tpu.vector_store %arg10[%c2_118, %c0_119, %c0_120], %114 {strides = array<i32>} : memref<15x8x224xf32, #tpu.memory_space<vmem>>, vector<1x8x224xf32>,
    %115 = vector.extract_strided_slice %102 {offsets = [16, 0], sizes = [8, 224], strides = [1, 1]} : vector<112x224xf32> to vector<8x224xf32>
    %c3_121 = arith.constant 3 : index
    %c0_122 = arith.constant 0 : index
    %c0_123 = arith.constant 0 : index
    %116 = vector.load %arg10[%c3_121, %c0_122, %c0_123] : memref<15x8x224xf32, #tpu.memory_space<vmem>>, vector<1x8x224xf32>
    %117 = vector.shape_cast %116 : vector<1x8x224xf32> to vector<8x224xf32>
    %118 = vector.shape_cast %115 : vector<8x224xf32> to vector<1x8x224xf32>
    tpu.vector_store %arg10[%c3_121, %c0_122, %c0_123], %118 {strides = array<i32>} : memref<15x8x224xf32, #tpu.memory_space<vmem>>, vector<1x8x224xf32>,
    %119 = vector.extract_strided_slice %102 {offsets = [24, 0], sizes = [8, 224], strides = [1, 1]} : vector<112x224xf32> to vector<8x224xf32>
    %c4_124 = arith.constant 4 : index
    %c0_125 = arith.constant 0 : index
    %c0_126 = arith.constant 0 : index
    %120 = vector.load %arg10[%c4_124, %c0_125, %c0_126] : memref<15x8x224xf32, #tpu.memory_space<vmem>>, vector<1x8x224xf32>
    %121 = vector.shape_cast %120 : vector<1x8x224xf32> to vector<8x224xf32>
    %122 = vector.shape_cast %119 : vector<8x224xf32> to vector<1x8x224xf32>
    tpu.vector_store %arg10[%c4_124, %c0_125, %c0_126], %122 {strides = array<i32>} : memref<15x8x224xf32, #tpu.memory_space<vmem>>, vector<1x8x224xf32>,
    %123 = vector.extract_strided_slice %102 {offsets = [32, 0], sizes = [8, 224], strides = [1, 1]} : vector<112x224xf32> to vector<8x224xf32>
    %c5_127 = arith.constant 5 : index
    %c0_128 = arith.constant 0 : index
    %c0_129 = arith.constant 0 : index
    %124 = vector.load %arg10[%c5_127, %c0_128, %c0_129] : memref<15x8x224xf32, #tpu.memory_space<vmem>>, vector<1x8x224xf32>
    %125 = vector.shape_cast %124 : vector<1x8x224xf32> to vector<8x224xf32>
    %126 = vector.shape_cast %123 : vector<8x224xf32> to vector<1x8x224xf32>
    tpu.vector_store %arg10[%c5_127, %c0_128, %c0_129], %126 {strides = array<i32>} : memref<15x8x224xf32, #tpu.memory_space<vmem>>, vector<1x8x224xf32>,
    %127 = vector.extract_strided_slice %102 {offsets = [40, 0], sizes = [8, 224], strides = [1, 1]} : vector<112x224xf32> to vector<8x224xf32>
    %c6_130 = arith.constant 6 : index
    %c0_131 = arith.constant 0 : index
    %c0_132 = arith.constant 0 : index
    %128 = vector.load %arg10[%c6_130, %c0_131, %c0_132] : memref<15x8x224xf32, #tpu.memory_space<vmem>>, vector<1x8x224xf32>
    %129 = vector.shape_cast %128 : vector<1x8x224xf32> to vector<8x224xf32>
    %130 = vector.shape_cast %127 : vector<8x224xf32> to vector<1x8x224xf32>
    tpu.vector_store %arg10[%c6_130, %c0_131, %c0_132], %130 {strides = array<i32>} : memref<15x8x224xf32, #tpu.memory_space<vmem>>, vector<1x8x224xf32>,
    %131 = vector.extract_strided_slice %102 {offsets = [48, 0], sizes = [8, 224], strides = [1, 1]} : vector<112x224xf32> to vector<8x224xf32>
    %c7_133 = arith.constant 7 : index
    %c0_134 = arith.constant 0 : index
    %c0_135 = arith.constant 0 : index
    %132 = vector.load %arg10[%c7_133, %c0_134, %c0_135] : memref<15x8x224xf32, #tpu.memory_space<vmem>>, vector<1x8x224xf32>
    %133 = vector.shape_cast %132 : vector<1x8x224xf32> to vector<8x224xf32>
    %134 = vector.shape_cast %131 : vector<8x224xf32> to vector<1x8x224xf32>
    tpu.vector_store %arg10[%c7_133, %c0_134, %c0_135], %134 {strides = array<i32>} : memref<15x8x224xf32, #tpu.memory_space<vmem>>, vector<1x8x224xf32>,
    %135 = vector.extract_strided_slice %102 {offsets = [56, 0], sizes = [8, 224], strides = [1, 1]} : vector<112x224xf32> to vector<8x224xf32>
    %c8_136 = arith.constant 8 : index
    %c0_137 = arith.constant 0 : index
    %c0_138 = arith.constant 0 : index
    %136 = vector.load %arg10[%c8_136, %c0_137, %c0_138] : memref<15x8x224xf32, #tpu.memory_space<vmem>>, vector<1x8x224xf32>
    %137 = vector.shape_cast %136 : vector<1x8x224xf32> to vector<8x224xf32>
    %138 = vector.shape_cast %135 : vector<8x224xf32> to vector<1x8x224xf32>
    tpu.vector_store %arg10[%c8_136, %c0_137, %c0_138], %138 {strides = array<i32>} : memref<15x8x224xf32, #tpu.memory_space<vmem>>, vector<1x8x224xf32>,
    %139 = vector.extract_strided_slice %102 {offsets = [64, 0], sizes = [8, 224], strides = [1, 1]} : vector<112x224xf32> to vector<8x224xf32>
    %c9_139 = arith.constant 9 : index
    %c0_140 = arith.constant 0 : index
    %c0_141 = arith.constant 0 : index
    %140 = vector.load %arg10[%c9_139, %c0_140, %c0_141] : memref<15x8x224xf32, #tpu.memory_space<vmem>>, vector<1x8x224xf32>
    %141 = vector.shape_cast %140 : vector<1x8x224xf32> to vector<8x224xf32>
    %142 = vector.shape_cast %139 : vector<8x224xf32> to vector<1x8x224xf32>
    tpu.vector_store %arg10[%c9_139, %c0_140, %c0_141], %142 {strides = array<i32>} : memref<15x8x224xf32, #tpu.memory_space<vmem>>, vector<1x8x224xf32>,
    %143 = vector.extract_strided_slice %102 {offsets = [72, 0], sizes = [8, 224], strides = [1, 1]} : vector<112x224xf32> to vector<8x224xf32>
    %c10_142 = arith.constant 10 : index
    %c0_143 = arith.constant 0 : index
    %c0_144 = arith.constant 0 : index
    %144 = vector.load %arg10[%c10_142, %c0_143, %c0_144] : memref<15x8x224xf32, #tpu.memory_space<vmem>>, vector<1x8x224xf32>
    %145 = vector.shape_cast %144 : vector<1x8x224xf32> to vector<8x224xf32>
    %146 = vector.shape_cast %143 : vector<8x224xf32> to vector<1x8x224xf32>
    tpu.vector_store %arg10[%c10_142, %c0_143, %c0_144], %146 {strides = array<i32>} : memref<15x8x224xf32, #tpu.memory_space<vmem>>, vector<1x8x224xf32>,
    %147 = vector.extract_strided_slice %102 {offsets = [80, 0], sizes = [8, 224], strides = [1, 1]} : vector<112x224xf32> to vector<8x224xf32>
    %c11_145 = arith.constant 11 : index
    %c0_146 = arith.constant 0 : index
    %c0_147 = arith.constant 0 : index
    %148 = vector.load %arg10[%c11_145, %c0_146, %c0_147] : memref<15x8x224xf32, #tpu.memory_space<vmem>>, vector<1x8x224xf32>
    %149 = vector.shape_cast %148 : vector<1x8x224xf32> to vector<8x224xf32>
    %150 = vector.shape_cast %147 : vector<8x224xf32> to vector<1x8x224xf32>
    tpu.vector_store %arg10[%c11_145, %c0_146, %c0_147], %150 {strides = array<i32>} : memref<15x8x224xf32, #tpu.memory_space<vmem>>, vector<1x8x224xf32>,
    %151 = vector.extract_strided_slice %102 {offsets = [88, 0], sizes = [8, 224], strides = [1, 1]} : vector<112x224xf32> to vector<8x224xf32>
    %c12_148 = arith.constant 12 : index
    %c0_149 = arith.constant 0 : index
    %c0_150 = arith.constant 0 : index
    %152 = vector.load %arg10[%c12_148, %c0_149, %c0_150] : memref<15x8x224xf32, #tpu.memory_space<vmem>>, vector<1x8x224xf32>
    %153 = vector.shape_cast %152 : vector<1x8x224xf32> to vector<8x224xf32>
    %154 = vector.shape_cast %151 : vector<8x224xf32> to vector<1x8x224xf32>
    tpu.vector_store %arg10[%c12_148, %c0_149, %c0_150], %154 {strides = array<i32>} : memref<15x8x224xf32, #tpu.memory_space<vmem>>, vector<1x8x224xf32>,
    %155 = vector.extract_strided_slice %102 {offsets = [96, 0], sizes = [8, 224], strides = [1, 1]} : vector<112x224xf32> to vector<8x224xf32>
    %c13_151 = arith.constant 13 : index
    %c0_152 = arith.constant 0 : index
    %c0_153 = arith.constant 0 : index
    %156 = vector.load %arg10[%c13_151, %c0_152, %c0_153] : memref<15x8x224xf32, #tpu.memory_space<vmem>>, vector<1x8x224xf32>
    %157 = vector.shape_cast %156 : vector<1x8x224xf32> to vector<8x224xf32>
    %158 = vector.shape_cast %155 : vector<8x224xf32> to vector<1x8x224xf32>
    tpu.vector_store %arg10[%c13_151, %c0_152, %c0_153], %158 {strides = array<i32>} : memref<15x8x224xf32, #tpu.memory_space<vmem>>, vector<1x8x224xf32>,
    %159 = vector.extract_strided_slice %102 {offsets = [104, 0], sizes = [8, 224], strides = [1, 1]} : vector<112x224xf32> to vector<8x224xf32>
    %c14_154 = arith.constant 14 : index
    %c0_155 = arith.constant 0 : index
    %c0_156 = arith.constant 0 : index
    %160 = vector.load %arg10[%c14_154, %c0_155, %c0_156] : memref<15x8x224xf32, #tpu.memory_space<vmem>>, vector<1x8x224xf32>
    %161 = vector.shape_cast %160 : vector<1x8x224xf32> to vector<8x224xf32>
    %162 = vector.shape_cast %159 : vector<8x224xf32> to vector<1x8x224xf32>
    tpu.vector_store %arg10[%c14_154, %c0_155, %c0_156], %162 {strides = array<i32>} : memref<15x8x224xf32, #tpu.memory_space<vmem>>, vector<1x8x224xf32>,
    %c0_157 = arith.constant 0 : index
    %c0_158 = arith.constant 0 : index
    %c0_159 = arith.constant 0 : index
    %163 = vector.load %arg10[%c0_157, %c0_158, %c0_159] : memref<15x8x224xf32, #tpu.memory_space<vmem>>, vector<1x8x224xf32>
    %164 = vector.shape_cast %163 : vector<1x8x224xf32> to vector<8x224xf32>
    %c2_160 = arith.constant 2 : index
    %c0_161 = arith.constant 0 : index
    %c0_162 = arith.constant 0 : index
    %165 = vector.load %arg10[%c2_160, %c0_161, %c0_162] : memref<15x8x224xf32, #tpu.memory_space<vmem>>, vector<1x8x224xf32>
    %166 = vector.shape_cast %165 : vector<1x8x224xf32> to vector<8x224xf32>
    %c4_163 = arith.constant 4 : index
    %c0_164 = arith.constant 0 : index
    %c0_165 = arith.constant 0 : index
    %167 = vector.load %arg10[%c4_163, %c0_164, %c0_165] : memref<15x8x224xf32, #tpu.memory_space<vmem>>, vector<1x8x224xf32>
    %168 = vector.shape_cast %167 : vector<1x8x224xf32> to vector<8x224xf32>
    %c6_166 = arith.constant 6 : index
    %c0_167 = arith.constant 0 : index
    %c0_168 = arith.constant 0 : index
    %169 = vector.load %arg10[%c6_166, %c0_167, %c0_168] : memref<15x8x224xf32, #tpu.memory_space<vmem>>, vector<1x8x224xf32>
    %170 = vector.shape_cast %169 : vector<1x8x224xf32> to vector<8x224xf32>
    %c8_169 = arith.constant 8 : index
    %c0_170 = arith.constant 0 : index
    %c0_171 = arith.constant 0 : index
    %171 = vector.load %arg10[%c8_169, %c0_170, %c0_171] : memref<15x8x224xf32, #tpu.memory_space<vmem>>, vector<1x8x224xf32>
    %172 = vector.shape_cast %171 : vector<1x8x224xf32> to vector<8x224xf32>
    %c10_172 = arith.constant 10 : index
    %c0_173 = arith.constant 0 : index
    %c0_174 = arith.constant 0 : index
    %173 = vector.load %arg10[%c10_172, %c0_173, %c0_174] : memref<15x8x224xf32, #tpu.memory_space<vmem>>, vector<1x8x224xf32>
    %174 = vector.shape_cast %173 : vector<1x8x224xf32> to vector<8x224xf32>
    %c12_175 = arith.constant 12 : index
    %c0_176 = arith.constant 0 : index
    %c0_177 = arith.constant 0 : index
    %175 = vector.load %arg10[%c12_175, %c0_176, %c0_177] : memref<15x8x224xf32, #tpu.memory_space<vmem>>, vector<1x8x224xf32>
    %176 = vector.shape_cast %175 : vector<1x8x224xf32> to vector<8x224xf32>
    %177 = tpu.concatenate %164, %166, %168, %170, %172, %174, %176 in 0 : vector<8x224xf32>, vector<8x224xf32>, vector<8x224xf32>, vector<8x224xf32>, vector<8x224xf32>, vector<8x224xf32>, vector<8x224xf32> -> vector<56x224xf32>
    %c0_178 = arith.constant 0 : index
    %c0_179 = arith.constant 0 : index
    %c0_180 = arith.constant 0 : index
    %178 = vector.load %arg4[%c0_178, %c0_179, %c0_180] : memref<3x224x112xf32, #tpu.memory_space<vmem>>, vector<1x224x112xf32>
    %179 = vector.shape_cast %178 : vector<1x224x112xf32> to vector<224x112xf32>
    %cst_181 = arith.constant dense<0.000000e+00> : vector<56x112xf32>
    %180 = tpu.matmul %177, %179, %cst_181 {dimension_numbers = #tpu.dot_dimension_numbers<[1], [0], [0], [1], [0, 0, 1, 1], [], []>} : vector<56x224xf32>, vector<224x112xf32>, vector<56x112xf32> -> vector<56x112xf32>
    %c1_182 = arith.constant 1 : index
    %c0_183 = arith.constant 0 : index
    %c0_184 = arith.constant 0 : index
    %181 = vector.load %arg10[%c1_182, %c0_183, %c0_184] : memref<15x8x224xf32, #tpu.memory_space<vmem>>, vector<1x8x224xf32>
    %182 = vector.shape_cast %181 : vector<1x8x224xf32> to vector<8x224xf32>
    %c3_185 = arith.constant 3 : index
    %c0_186 = arith.constant 0 : index
    %c0_187 = arith.constant 0 : index
    %183 = vector.load %arg10[%c3_185, %c0_186, %c0_187] : memref<15x8x224xf32, #tpu.memory_space<vmem>>, vector<1x8x224xf32>
    %184 = vector.shape_cast %183 : vector<1x8x224xf32> to vector<8x224xf32>
    %c5_188 = arith.constant 5 : index
    %c0_189 = arith.constant 0 : index
    %c0_190 = arith.constant 0 : index
    %185 = vector.load %arg10[%c5_188, %c0_189, %c0_190] : memref<15x8x224xf32, #tpu.memory_space<vmem>>, vector<1x8x224xf32>
    %186 = vector.shape_cast %185 : vector<1x8x224xf32> to vector<8x224xf32>
    %c7_191 = arith.constant 7 : index
    %c0_192 = arith.constant 0 : index
    %c0_193 = arith.constant 0 : index
    %187 = vector.load %arg10[%c7_191, %c0_192, %c0_193] : memref<15x8x224xf32, #tpu.memory_space<vmem>>, vector<1x8x224xf32>
    %188 = vector.shape_cast %187 : vector<1x8x224xf32> to vector<8x224xf32>
    %c9_194 = arith.constant 9 : index
    %c0_195 = arith.constant 0 : index
    %c0_196 = arith.constant 0 : index
    %189 = vector.load %arg10[%c9_194, %c0_195, %c0_196] : memref<15x8x224xf32, #tpu.memory_space<vmem>>, vector<1x8x224xf32>
    %190 = vector.shape_cast %189 : vector<1x8x224xf32> to vector<8x224xf32>
    %c11_197 = arith.constant 11 : index
    %c0_198 = arith.constant 0 : index
    %c0_199 = arith.constant 0 : index
    %191 = vector.load %arg10[%c11_197, %c0_198, %c0_199] : memref<15x8x224xf32, #tpu.memory_space<vmem>>, vector<1x8x224xf32>
    %192 = vector.shape_cast %191 : vector<1x8x224xf32> to vector<8x224xf32>
    %c13_200 = arith.constant 13 : index
    %c0_201 = arith.constant 0 : index
    %c0_202 = arith.constant 0 : index
    %193 = vector.load %arg10[%c13_200, %c0_201, %c0_202] : memref<15x8x224xf32, #tpu.memory_space<vmem>>, vector<1x8x224xf32>
    %194 = vector.shape_cast %193 : vector<1x8x224xf32> to vector<8x224xf32>
    %195 = tpu.concatenate %182, %184, %186, %188, %190, %192, %194 in 0 : vector<8x224xf32>, vector<8x224xf32>, vector<8x224xf32>, vector<8x224xf32>, vector<8x224xf32>, vector<8x224xf32>, vector<8x224xf32> -> vector<56x224xf32>
    %c1_203 = arith.constant 1 : index
    %c0_204 = arith.constant 0 : index
    %c0_205 = arith.constant 0 : index
    %196 = vector.load %arg4[%c1_203, %c0_204, %c0_205] : memref<3x224x112xf32, #tpu.memory_space<vmem>>, vector<1x224x112xf32>
    %197 = vector.shape_cast %196 : vector<1x224x112xf32> to vector<224x112xf32>
    %cst_206 = arith.constant dense<0.000000e+00> : vector<56x112xf32>
    %198 = tpu.matmul %195, %197, %cst_206 {dimension_numbers = #tpu.dot_dimension_numbers<[1], [0], [0], [1], [0, 0, 1, 1], [], []>} : vector<56x224xf32>, vector<224x112xf32>, vector<56x112xf32> -> vector<56x112xf32>
    %199 = arith.addf %180, %198 : vector<56x112xf32>
    %c2_207 = arith.constant 2 : index
    %c0_208 = arith.constant 0 : index
    %c0_209 = arith.constant 0 : index
    %200 = vector.load %arg10[%c2_207, %c0_208, %c0_209] : memref<15x8x224xf32, #tpu.memory_space<vmem>>, vector<1x8x224xf32>
    %201 = vector.shape_cast %200 : vector<1x8x224xf32> to vector<8x224xf32>
    %c4_210 = arith.constant 4 : index
    %c0_211 = arith.constant 0 : index
    %c0_212 = arith.constant 0 : index
    %202 = vector.load %arg10[%c4_210, %c0_211, %c0_212] : memref<15x8x224xf32, #tpu.memory_space<vmem>>, vector<1x8x224xf32>
    %203 = vector.shape_cast %202 : vector<1x8x224xf32> to vector<8x224xf32>
    %c6_213 = arith.constant 6 : index
    %c0_214 = arith.constant 0 : index
    %c0_215 = arith.constant 0 : index
    %204 = vector.load %arg10[%c6_213, %c0_214, %c0_215] : memref<15x8x224xf32, #tpu.memory_space<vmem>>, vector<1x8x224xf32>
    %205 = vector.shape_cast %204 : vector<1x8x224xf32> to vector<8x224xf32>
    %c8_216 = arith.constant 8 : index
    %c0_217 = arith.constant 0 : index
    %c0_218 = arith.constant 0 : index
    %206 = vector.load %arg10[%c8_216, %c0_217, %c0_218] : memref<15x8x224xf32, #tpu.memory_space<vmem>>, vector<1x8x224xf32>
    %207 = vector.shape_cast %206 : vector<1x8x224xf32> to vector<8x224xf32>
    %c10_219 = arith.constant 10 : index
    %c0_220 = arith.constant 0 : index
    %c0_221 = arith.constant 0 : index
    %208 = vector.load %arg10[%c10_219, %c0_220, %c0_221] : memref<15x8x224xf32, #tpu.memory_space<vmem>>, vector<1x8x224xf32>
    %209 = vector.shape_cast %208 : vector<1x8x224xf32> to vector<8x224xf32>
    %c12_222 = arith.constant 12 : index
    %c0_223 = arith.constant 0 : index
    %c0_224 = arith.constant 0 : index
    %210 = vector.load %arg10[%c12_222, %c0_223, %c0_224] : memref<15x8x224xf32, #tpu.memory_space<vmem>>, vector<1x8x224xf32>
    %211 = vector.shape_cast %210 : vector<1x8x224xf32> to vector<8x224xf32>
    %c14_225 = arith.constant 14 : index
    %c0_226 = arith.constant 0 : index
    %c0_227 = arith.constant 0 : index
    %212 = vector.load %arg10[%c14_225, %c0_226, %c0_227] : memref<15x8x224xf32, #tpu.memory_space<vmem>>, vector<1x8x224xf32>
    %213 = vector.shape_cast %212 : vector<1x8x224xf32> to vector<8x224xf32>
    %214 = tpu.concatenate %201, %203, %205, %207, %209, %211, %213 in 0 : vector<8x224xf32>, vector<8x224xf32>, vector<8x224xf32>, vector<8x224xf32>, vector<8x224xf32>, vector<8x224xf32>, vector<8x224xf32> -> vector<56x224xf32>
    %c2_228 = arith.constant 2 : index
    %c0_229 = arith.constant 0 : index
    %c0_230 = arith.constant 0 : index
    %215 = vector.load %arg4[%c2_228, %c0_229, %c0_230] : memref<3x224x112xf32, #tpu.memory_space<vmem>>, vector<1x224x112xf32>
    %216 = vector.shape_cast %215 : vector<1x224x112xf32> to vector<224x112xf32>
    %cst_231 = arith.constant dense<0.000000e+00> : vector<56x112xf32>
    %217 = tpu.matmul %214, %216, %cst_231 {dimension_numbers = #tpu.dot_dimension_numbers<[1], [0], [0], [1], [0, 0, 1, 1], [], []>} : vector<56x224xf32>, vector<224x112xf32>, vector<56x112xf32> -> vector<56x112xf32>
    %218 = arith.addf %199, %217 : vector<56x112xf32>
    %c0_232 = arith.constant 0 : index
    %c0_233 = arith.constant 0 : index
    %219 = vector.load %arg5[%c0_232, %c0_233] : memref<1x112xf32, #tpu.memory_space<vmem>>, vector<1x112xf32>
    %220 = vector.broadcast %219 : vector<1x112xf32> to vector<56x112xf32>
    %221 = arith.addf %218, %220 : vector<56x112xf32>
    %cst_234 = arith.constant 0.000000e+00 : f32
    %222 = vector.broadcast %cst_234 : f32 to vector<56x112xf32>
    %223 = arith.maximumf %221, %222 : vector<56x112xf32>
    %cst_235 = arith.constant 0.000000e+00 : f32
    %224 = vector.broadcast %cst_235 : f32 to vector<8x112xf32>
    %c0_236 = arith.constant 0 : index
    %c0_237 = arith.constant 0 : index
    %c0_238 = arith.constant 0 : index
    %225 = vector.load %arg11[%c0_236, %c0_237, %c0_238] : memref<9x8x112xf32, #tpu.memory_space<vmem>>, vector<1x8x112xf32>
    %226 = vector.shape_cast %225 : vector<1x8x112xf32> to vector<8x112xf32>
    %227 = vector.shape_cast %224 : vector<8x112xf32> to vector<1x8x112xf32>
    tpu.vector_store %arg11[%c0_236, %c0_237, %c0_238], %227 {strides = array<i32>} : memref<9x8x112xf32, #tpu.memory_space<vmem>>, vector<1x8x112xf32>,
    %cst_239 = arith.constant 0.000000e+00 : f32
    %228 = vector.broadcast %cst_239 : f32 to vector<8x112xf32>
    %c8_240 = arith.constant 8 : index
    %c0_241 = arith.constant 0 : index
    %c0_242 = arith.constant 0 : index
    %229 = vector.load %arg11[%c8_240, %c0_241, %c0_242] : memref<9x8x112xf32, #tpu.memory_space<vmem>>, vector<1x8x112xf32>
    %230 = vector.shape_cast %229 : vector<1x8x112xf32> to vector<8x112xf32>
    %231 = vector.shape_cast %228 : vector<8x112xf32> to vector<1x8x112xf32>
    tpu.vector_store %arg11[%c8_240, %c0_241, %c0_242], %231 {strides = array<i32>} : memref<9x8x112xf32, #tpu.memory_space<vmem>>, vector<1x8x112xf32>,
    %232 = vector.extract_strided_slice %223 {offsets = [0, 0], sizes = [8, 112], strides = [1, 1]} : vector<56x112xf32> to vector<8x112xf32>
    %c1_243 = arith.constant 1 : index
    %c0_244 = arith.constant 0 : index
    %c0_245 = arith.constant 0 : index
    %233 = vector.load %arg11[%c1_243, %c0_244, %c0_245] : memref<9x8x112xf32, #tpu.memory_space<vmem>>, vector<1x8x112xf32>
    %234 = vector.shape_cast %233 : vector<1x8x112xf32> to vector<8x112xf32>
    %235 = vector.shape_cast %232 : vector<8x112xf32> to vector<1x8x112xf32>
    tpu.vector_store %arg11[%c1_243, %c0_244, %c0_245], %235 {strides = array<i32>} : memref<9x8x112xf32, #tpu.memory_space<vmem>>, vector<1x8x112xf32>,
    %236 = vector.extract_strided_slice %223 {offsets = [8, 0], sizes = [8, 112], strides = [1, 1]} : vector<56x112xf32> to vector<8x112xf32>
    %c2_246 = arith.constant 2 : index
    %c0_247 = arith.constant 0 : index
    %c0_248 = arith.constant 0 : index
    %237 = vector.load %arg11[%c2_246, %c0_247, %c0_248] : memref<9x8x112xf32, #tpu.memory_space<vmem>>, vector<1x8x112xf32>
    %238 = vector.shape_cast %237 : vector<1x8x112xf32> to vector<8x112xf32>
    %239 = vector.shape_cast %236 : vector<8x112xf32> to vector<1x8x112xf32>
    tpu.vector_store %arg11[%c2_246, %c0_247, %c0_248], %239 {strides = array<i32>} : memref<9x8x112xf32, #tpu.memory_space<vmem>>, vector<1x8x112xf32>,
    %240 = vector.extract_strided_slice %223 {offsets = [16, 0], sizes = [8, 112], strides = [1, 1]} : vector<56x112xf32> to vector<8x112xf32>
    %c3_249 = arith.constant 3 : index
    %c0_250 = arith.constant 0 : index
    %c0_251 = arith.constant 0 : index
    %241 = vector.load %arg11[%c3_249, %c0_250, %c0_251] : memref<9x8x112xf32, #tpu.memory_space<vmem>>, vector<1x8x112xf32>
    %242 = vector.shape_cast %241 : vector<1x8x112xf32> to vector<8x112xf32>
    %243 = vector.shape_cast %240 : vector<8x112xf32> to vector<1x8x112xf32>
    tpu.vector_store %arg11[%c3_249, %c0_250, %c0_251], %243 {strides = array<i32>} : memref<9x8x112xf32, #tpu.memory_space<vmem>>, vector<1x8x112xf32>,
    %244 = vector.extract_strided_slice %223 {offsets = [24, 0], sizes = [8, 112], strides = [1, 1]} : vector<56x112xf32> to vector<8x112xf32>
    %c4_252 = arith.constant 4 : index
    %c0_253 = arith.constant 0 : index
    %c0_254 = arith.constant 0 : index
    %245 = vector.load %arg11[%c4_252, %c0_253, %c0_254] : memref<9x8x112xf32, #tpu.memory_space<vmem>>, vector<1x8x112xf32>
    %246 = vector.shape_cast %245 : vector<1x8x112xf32> to vector<8x112xf32>
    %247 = vector.shape_cast %244 : vector<8x112xf32> to vector<1x8x112xf32>
    tpu.vector_store %arg11[%c4_252, %c0_253, %c0_254], %247 {strides = array<i32>} : memref<9x8x112xf32, #tpu.memory_space<vmem>>, vector<1x8x112xf32>,
    %248 = vector.extract_strided_slice %223 {offsets = [32, 0], sizes = [8, 112], strides = [1, 1]} : vector<56x112xf32> to vector<8x112xf32>
    %c5_255 = arith.constant 5 : index
    %c0_256 = arith.constant 0 : index
    %c0_257 = arith.constant 0 : index
    %249 = vector.load %arg11[%c5_255, %c0_256, %c0_257] : memref<9x8x112xf32, #tpu.memory_space<vmem>>, vector<1x8x112xf32>
    %250 = vector.shape_cast %249 : vector<1x8x112xf32> to vector<8x112xf32>
    %251 = vector.shape_cast %248 : vector<8x112xf32> to vector<1x8x112xf32>
    tpu.vector_store %arg11[%c5_255, %c0_256, %c0_257], %251 {strides = array<i32>} : memref<9x8x112xf32, #tpu.memory_space<vmem>>, vector<1x8x112xf32>,
    %252 = vector.extract_strided_slice %223 {offsets = [40, 0], sizes = [8, 112], strides = [1, 1]} : vector<56x112xf32> to vector<8x112xf32>
    %c6_258 = arith.constant 6 : index
    %c0_259 = arith.constant 0 : index
    %c0_260 = arith.constant 0 : index
    %253 = vector.load %arg11[%c6_258, %c0_259, %c0_260] : memref<9x8x112xf32, #tpu.memory_space<vmem>>, vector<1x8x112xf32>
    %254 = vector.shape_cast %253 : vector<1x8x112xf32> to vector<8x112xf32>
    %255 = vector.shape_cast %252 : vector<8x112xf32> to vector<1x8x112xf32>
    tpu.vector_store %arg11[%c6_258, %c0_259, %c0_260], %255 {strides = array<i32>} : memref<9x8x112xf32, #tpu.memory_space<vmem>>, vector<1x8x112xf32>,
    %256 = vector.extract_strided_slice %223 {offsets = [48, 0], sizes = [8, 112], strides = [1, 1]} : vector<56x112xf32> to vector<8x112xf32>
    %c7_261 = arith.constant 7 : index
    %c0_262 = arith.constant 0 : index
    %c0_263 = arith.constant 0 : index
    %257 = vector.load %arg11[%c7_261, %c0_262, %c0_263] : memref<9x8x112xf32, #tpu.memory_space<vmem>>, vector<1x8x112xf32>
    %258 = vector.shape_cast %257 : vector<1x8x112xf32> to vector<8x112xf32>
    %259 = vector.shape_cast %256 : vector<8x112xf32> to vector<1x8x112xf32>
    tpu.vector_store %arg11[%c7_261, %c0_262, %c0_263], %259 {strides = array<i32>} : memref<9x8x112xf32, #tpu.memory_space<vmem>>, vector<1x8x112xf32>,
    %c0_264 = arith.constant 0 : index
    %c0_265 = arith.constant 0 : index
    %c0_266 = arith.constant 0 : index
    %260 = vector.load %arg11[%c0_264, %c0_265, %c0_266] : memref<9x8x112xf32, #tpu.memory_space<vmem>>, vector<1x8x112xf32>
    %261 = vector.shape_cast %260 : vector<1x8x112xf32> to vector<8x112xf32>
    %c2_267 = arith.constant 2 : index
    %c0_268 = arith.constant 0 : index
    %c0_269 = arith.constant 0 : index
    %262 = vector.load %arg11[%c2_267, %c0_268, %c0_269] : memref<9x8x112xf32, #tpu.memory_space<vmem>>, vector<1x8x112xf32>
    %263 = vector.shape_cast %262 : vector<1x8x112xf32> to vector<8x112xf32>
    %c4_270 = arith.constant 4 : index
    %c0_271 = arith.constant 0 : index
    %c0_272 = arith.constant 0 : index
    %264 = vector.load %arg11[%c4_270, %c0_271, %c0_272] : memref<9x8x112xf32, #tpu.memory_space<vmem>>, vector<1x8x112xf32>
    %265 = vector.shape_cast %264 : vector<1x8x112xf32> to vector<8x112xf32>
    %c6_273 = arith.constant 6 : index
    %c0_274 = arith.constant 0 : index
    %c0_275 = arith.constant 0 : index
    %266 = vector.load %arg11[%c6_273, %c0_274, %c0_275] : memref<9x8x112xf32, #tpu.memory_space<vmem>>, vector<1x8x112xf32>
    %267 = vector.shape_cast %266 : vector<1x8x112xf32> to vector<8x112xf32>
    %268 = tpu.concatenate %261, %263, %265, %267 in 0 : vector<8x112xf32>, vector<8x112xf32>, vector<8x112xf32>, vector<8x112xf32> -> vector<32x112xf32>
    %c0_276 = arith.constant 0 : index
    %c0_277 = arith.constant 0 : index
    %c0_278 = arith.constant 0 : index
    %269 = vector.load %arg6[%c0_276, %c0_277, %c0_278] : memref<3x112x40xf32, #tpu.memory_space<vmem>>, vector<1x112x40xf32>
    %270 = vector.shape_cast %269 : vector<1x112x40xf32> to vector<112x40xf32>
    %cst_279 = arith.constant dense<0.000000e+00> : vector<32x40xf32>
    %271 = tpu.matmul %268, %270, %cst_279 {dimension_numbers = #tpu.dot_dimension_numbers<[1], [0], [0], [1], [0, 0, 1, 1], [], []>} : vector<32x112xf32>, vector<112x40xf32>, vector<32x40xf32> -> vector<32x40xf32>
    %c1_280 = arith.constant 1 : index
    %c0_281 = arith.constant 0 : index
    %c0_282 = arith.constant 0 : index
    %272 = vector.load %arg11[%c1_280, %c0_281, %c0_282] : memref<9x8x112xf32, #tpu.memory_space<vmem>>, vector<1x8x112xf32>
    %273 = vector.shape_cast %272 : vector<1x8x112xf32> to vector<8x112xf32>
    %c3_283 = arith.constant 3 : index
    %c0_284 = arith.constant 0 : index
    %c0_285 = arith.constant 0 : index
    %274 = vector.load %arg11[%c3_283, %c0_284, %c0_285] : memref<9x8x112xf32, #tpu.memory_space<vmem>>, vector<1x8x112xf32>
    %275 = vector.shape_cast %274 : vector<1x8x112xf32> to vector<8x112xf32>
    %c5_286 = arith.constant 5 : index
    %c0_287 = arith.constant 0 : index
    %c0_288 = arith.constant 0 : index
    %276 = vector.load %arg11[%c5_286, %c0_287, %c0_288] : memref<9x8x112xf32, #tpu.memory_space<vmem>>, vector<1x8x112xf32>
    %277 = vector.shape_cast %276 : vector<1x8x112xf32> to vector<8x112xf32>
    %c7_289 = arith.constant 7 : index
    %c0_290 = arith.constant 0 : index
    %c0_291 = arith.constant 0 : index
    %278 = vector.load %arg11[%c7_289, %c0_290, %c0_291] : memref<9x8x112xf32, #tpu.memory_space<vmem>>, vector<1x8x112xf32>
    %279 = vector.shape_cast %278 : vector<1x8x112xf32> to vector<8x112xf32>
    %280 = tpu.concatenate %273, %275, %277, %279 in 0 : vector<8x112xf32>, vector<8x112xf32>, vector<8x112xf32>, vector<8x112xf32> -> vector<32x112xf32>
    %c1_292 = arith.constant 1 : index
    %c0_293 = arith.constant 0 : index
    %c0_294 = arith.constant 0 : index
    %281 = vector.load %arg6[%c1_292, %c0_293, %c0_294] : memref<3x112x40xf32, #tpu.memory_space<vmem>>, vector<1x112x40xf32>
    %282 = vector.shape_cast %281 : vector<1x112x40xf32> to vector<112x40xf32>
    %cst_295 = arith.constant dense<0.000000e+00> : vector<32x40xf32>
    %283 = tpu.matmul %280, %282, %cst_295 {dimension_numbers = #tpu.dot_dimension_numbers<[1], [0], [0], [1], [0, 0, 1, 1], [], []>} : vector<32x112xf32>, vector<112x40xf32>, vector<32x40xf32> -> vector<32x40xf32>
    %284 = arith.addf %271, %283 : vector<32x40xf32>
    %c2_296 = arith.constant 2 : index
    %c0_297 = arith.constant 0 : index
    %c0_298 = arith.constant 0 : index
    %285 = vector.load %arg11[%c2_296, %c0_297, %c0_298] : memref<9x8x112xf32, #tpu.memory_space<vmem>>, vector<1x8x112xf32>
    %286 = vector.shape_cast %285 : vector<1x8x112xf32> to vector<8x112xf32>
    %c4_299 = arith.constant 4 : index
    %c0_300 = arith.constant 0 : index
    %c0_301 = arith.constant 0 : index
    %287 = vector.load %arg11[%c4_299, %c0_300, %c0_301] : memref<9x8x112xf32, #tpu.memory_space<vmem>>, vector<1x8x112xf32>
    %288 = vector.shape_cast %287 : vector<1x8x112xf32> to vector<8x112xf32>
    %c6_302 = arith.constant 6 : index
    %c0_303 = arith.constant 0 : index
    %c0_304 = arith.constant 0 : index
    %289 = vector.load %arg11[%c6_302, %c0_303, %c0_304] : memref<9x8x112xf32, #tpu.memory_space<vmem>>, vector<1x8x112xf32>
    %290 = vector.shape_cast %289 : vector<1x8x112xf32> to vector<8x112xf32>
    %c8_305 = arith.constant 8 : index
    %c0_306 = arith.constant 0 : index
    %c0_307 = arith.constant 0 : index
    %291 = vector.load %arg11[%c8_305, %c0_306, %c0_307] : memref<9x8x112xf32, #tpu.memory_space<vmem>>, vector<1x8x112xf32>
    %292 = vector.shape_cast %291 : vector<1x8x112xf32> to vector<8x112xf32>
    %293 = tpu.concatenate %286, %288, %290, %292 in 0 : vector<8x112xf32>, vector<8x112xf32>, vector<8x112xf32>, vector<8x112xf32> -> vector<32x112xf32>
    %c2_308 = arith.constant 2 : index
    %c0_309 = arith.constant 0 : index
    %c0_310 = arith.constant 0 : index
    %294 = vector.load %arg6[%c2_308, %c0_309, %c0_310] : memref<3x112x40xf32, #tpu.memory_space<vmem>>, vector<1x112x40xf32>
    %295 = vector.shape_cast %294 : vector<1x112x40xf32> to vector<112x40xf32>
    %cst_311 = arith.constant dense<0.000000e+00> : vector<32x40xf32>
    %296 = tpu.matmul %293, %295, %cst_311 {dimension_numbers = #tpu.dot_dimension_numbers<[1], [0], [0], [1], [0, 0, 1, 1], [], []>} : vector<32x112xf32>, vector<112x40xf32>, vector<32x40xf32> -> vector<32x40xf32>
    %297 = arith.addf %284, %296 : vector<32x40xf32>
    %c0_312 = arith.constant 0 : index
    %c0_313 = arith.constant 0 : index
    %298 = vector.load %arg7[%c0_312, %c0_313] : memref<1x40xf32, #tpu.memory_space<vmem>>, vector<1x40xf32>
    %299 = vector.broadcast %298 : vector<1x40xf32> to vector<32x40xf32>
    %300 = arith.addf %297, %299 : vector<32x40xf32>
    %cst_314 = arith.constant 0.000000e+00 : f32
    %301 = vector.broadcast %cst_314 : f32 to vector<32x40xf32>
    %302 = arith.maximumf %300, %301 : vector<32x40xf32>
    %303 = vector.extract_strided_slice %302 {offsets = [0, 0], sizes = [8, 40], strides = [1, 1]} : vector<32x40xf32> to vector<8x40xf32>
    %304 = vector.extract_strided_slice %302 {offsets = [8, 0], sizes = [8, 40], strides = [1, 1]} : vector<32x40xf32> to vector<8x40xf32>
    %305 = arith.addf %303, %304 : vector<8x40xf32>
    %306 = vector.extract_strided_slice %302 {offsets = [16, 0], sizes = [8, 40], strides = [1, 1]} : vector<32x40xf32> to vector<8x40xf32>
    %307 = arith.addf %305, %306 : vector<8x40xf32>
    %308 = vector.extract_strided_slice %302 {offsets = [24, 0], sizes = [8, 40], strides = [1, 1]} : vector<32x40xf32> to vector<8x40xf32>
    %309 = arith.addf %307, %308 : vector<8x40xf32>
    %c0_315 = arith.constant 0 : index
    %c0_316 = arith.constant 0 : index
    %310 = vector.load %arg8[%c0_315, %c0_316] : memref<40x10xf32, #tpu.memory_space<vmem>>, vector<40x10xf32>
    %cst_317 = arith.constant dense<0.000000e+00> : vector<8x10xf32>
    %311 = tpu.matmul %309, %310, %cst_317 {dimension_numbers = #tpu.dot_dimension_numbers<[1], [0], [0], [1], [0, 0, 1, 1], [], []>} : vector<8x40xf32>, vector<40x10xf32>, vector<8x10xf32> -> vector<8x10xf32>
    %c0_318 = arith.constant 0 : index
    %c0_319 = arith.constant 0 : index
    %312 = vector.load %arg9[%c0_318, %c0_319] : memref<8x10xf32, #tpu.memory_space<vmem>>, vector<8x10xf32>
    tpu.vector_store %arg9[%c0_318, %c0_319], %311 {strides = array<i32>} : memref<8x10xf32, #tpu.memory_space<vmem>>, vector<8x10xf32>,
    return
  }
  func.func @transform_0(%arg0: i32) -> (i32, i32, i32) {
    %c0_i32 = arith.constant 0 : i32
    %c0_i32_0 = arith.constant 0 : i32
    %c0_i32_1 = arith.constant 0 : i32
    return %c0_i32, %arg0, %c0_i32_0 : i32, i32, i32
  }
  func.func @transform_1(%arg0: i32) -> (i32, i32, i32) {
    %c0_i32 = arith.constant 0 : i32
    %c0_i32_0 = arith.constant 0 : i32
    %c0_i32_1 = arith.constant 0 : i32
    %c0_i32_2 = arith.constant 0 : i32
    return %c0_i32, %c0_i32_0, %c0_i32_1 : i32, i32, i32
  }
  func.func @transform_2(%arg0: i32) -> (i32, i32) {
    %c0_i32 = arith.constant 0 : i32
    %c0_i32_0 = arith.constant 0 : i32
    %c0_i32_1 = arith.constant 0 : i32
    return %c0_i32, %c0_i32_0 : i32, i32
  }
  func.func @transform_3(%arg0: i32) -> (i32, i32, i32) {
    %c0_i32 = arith.constant 0 : i32
    %c0_i32_0 = arith.constant 0 : i32
    %c0_i32_1 = arith.constant 0 : i32
    %c0_i32_2 = arith.constant 0 : i32
    return %c0_i32, %c0_i32_0, %c0_i32_1 : i32, i32, i32
  }
  func.func @transform_4(%arg0: i32) -> (i32, i32) {
    %c0_i32 = arith.constant 0 : i32
    %c0_i32_0 = arith.constant 0 : i32
    %c0_i32_1 = arith.constant 0 : i32
    return %c0_i32, %c0_i32_0 : i32, i32
  }
  func.func @transform_5(%arg0: i32) -> (i32, i32, i32) {
    %c0_i32 = arith.constant 0 : i32
    %c0_i32_0 = arith.constant 0 : i32
    %c0_i32_1 = arith.constant 0 : i32
    %c0_i32_2 = arith.constant 0 : i32
    return %c0_i32, %c0_i32_0, %c0_i32_1 : i32, i32, i32
  }
  func.func @transform_6(%arg0: i32) -> (i32, i32) {
    %c0_i32 = arith.constant 0 : i32
    %c0_i32_0 = arith.constant 0 : i32
    %c0_i32_1 = arith.constant 0 : i32
    return %c0_i32, %c0_i32_0 : i32, i32
  }
  func.func @transform_7(%arg0: i32) -> (i32, i32) {
    %c0_i32 = arith.constant 0 : i32
    %c0_i32_0 = arith.constant 0 : i32
    %c0_i32_1 = arith.constant 0 : i32
    return %c0_i32, %c0_i32_0 : i32, i32
  }
  func.func @transform_8(%arg0: i32) -> (i32, i32) {
    %c0_i32 = arith.constant 0 : i32
    %c0_i32_0 = arith.constant 0 : i32
    return %arg0, %c0_i32 : i32, i32
  }
}

</mosaic_0001>

<llo_original>
// kernel: tile.18
$region0: #{tile.18}
  #allocation0 [shape = 's32[1]{0}', space=sflag, size = 0x4, scoped, tag = 'scoped memory for tile.18']
  %s0 = inlined_call_operand.vmem [shape: f32[16], index: 0, kind: input, shape index: {}]
  %s1 = inlined_call_operand.vmem [shape: f32[14,16], index: 1, kind: output, shape index: {}]
  // Predicated region
  $region2: #{tile.18} parent=0 // pred_check
    _
  $region3: #{tile.18} parent=0 // pred_check_branch
    %3 = sbr.rel (0) target = $region5
  $region4: #{tile.18} parent=0 // pred_region
    _
  $region5: #{tile.18} parent=0 // pred_fallthru
    _
  %v4 = vld [vmem:[%s0] ss:$0 sm:$0xff]
  %5 = vst [vmem:[%s1] sm:$0xff] %v4
  %s6 = scalar_lea.vmem %s1, 8
  %7 = vst [vmem:[%s6] sm:$0xff] %v4

// kernel: tile.19
$region0: #{tile.19}
  %s0 = inlined_call_operand.vmem [shape: f32[14,16], index: 0, kind: input, shape index: {}]
  %s1 = inlined_call_operand.vmem [shape: f32[1,224], index: 1, kind: output, shape index: {}]
  $region1: #{tile.19} parent=0
    #allocation0 [shape = 'u8[8192]{0}', space=vmem, size = 0x2000, scoped, tag = 'scoped mem for output reshape']
    %s2 = smov 3
    %v3 = vld [vmem:[%s0] ss:$8 sm:%s2]
    %vm4 = vcmask 130048
    %5 = vst.msk [vmem:[#allocation0] ss:$8 sm:$0x3] %vm4, %v3
    %s6 = scalar_lea.vmem %s0, 7
    %v7 = vld [vmem:[%s6] sm:$0x1]
    %8 = vrot.lane.b32.xlu0 %v7, 112
    %v9 = vpop.permute.xlu0 %8
    %vm10 = vcmask 1048448
    %11 = vst.msk [vmem:[#allocation0] sm:$0x1] %vm10, %v9
    %s12 = scalar_lea.vmem %s0, 6
    %v13 = vld [vmem:[%s12] sm:$0x1]
    %14 = vrot.lane.b32.xlu0 %v13, 96
    %v15 = vpop.permute.xlu0 %14
    %vm16 = vcmask 917248
    %17 = vst.msk [vmem:[#allocation0] sm:$0x1] %vm16, %v15
    %s18 = scalar_lea.vmem %s0, 5
    %s19 = smov 3
    %v20 = vld [vmem:[%s18] ss:$8 sm:%s19]
    %21 = vrot.lane.b32.xlu0 %v20, 80
    %v22 = vpop.permute.xlu0 %21
    %vm23 = vcmask 786048
    %24 = vst.msk [vmem:[#allocation0] ss:$8 sm:$0x3] %vm23, %v22
    %s25 = scalar_lea.vmem %s0, 4
    %s26 = smov 3
    %v27 = vld [vmem:[%s25] ss:$8 sm:%s26]
    %28 = vrot.lane.b32.xlu0 %v27, 64
    %v29 = vpop.permute.xlu0 %28
    %vm30 = vcmask 654848
    %31 = vst.msk [vmem:[#allocation0] ss:$8 sm:$0x3] %vm30, %v29
    %s32 = scalar_lea.vmem %s0, 3
    %s33 = smov 3
    %v34 = vld [vmem:[%s32] ss:$8 sm:%s33]
    %35 = vrot.lane.b32.xlu0 %v34, 48
    %v36 = vpop.permute.xlu0 %35
    %vm37 = vcmask 523648
    %38 = vst.msk [vmem:[#allocation0] ss:$8 sm:$0x3] %vm37, %v36
    %s39 = scalar_lea.vmem %s0, 2
    %s40 = smov 3
    %v41 = vld [vmem:[%s39] ss:$8 sm:%s40]
    %42 = vrot.lane.b32.xlu0 %v41, 32
    %v43 = vpop.permute.xlu0 %42
    %vm44 = vcmask 392448
    %45 = vst.msk [vmem:[#allocation0] ss:$8 sm:$0x3] %vm44, %v43
    %s46 = scalar_lea.vmem %s0, 1
    %s47 = smov 3
    %v48 = vld [vmem:[%s46] ss:$8 sm:%s47]
    %49 = vrot.lane.b32.xlu0 %v48, 16
    %v50 = vpop.permute.xlu0 %49
    %vm51 = vcmask 261248
    %52 = vst.msk [vmem:[#allocation0] ss:$8 sm:$0x3] %vm51, %v50
    %s54 = ssub.s32 2, 1
    %v55 = vld [vmem:[#allocation0] sm:%s54]
    %s57 = ssub.s32 2, 1
    %58 = vst [vmem:[%s1] sm:%s57] %v55
    %s59 = scalar_lea.vmem [#allocation0], 8
    %v60 = vld [vmem:[%s59] sm:%s54]
    %s62 = ssub.s32 2, 1
    %s63 = scalar_lea.vmem %s1, 1
    %64 = vst [vmem:[%s63] sm:%s62] %v60

// kernel: tile.23
$region0: #{tile.23}
  #allocation0 [shape = 's32[1]{0}', space=sflag, size = 0x4, scoped, tag = 'scoped memory for tile.23']
  %s0 = inlined_call_operand.vmem [shape: f32[16], index: 0, kind: input, shape index: {}]
  %s1 = inlined_call_operand.vmem [shape: f32[7,16], index: 1, kind: output, shape index: {}]
  // Predicated region
  $region2: #{tile.23} parent=0 // pred_check
    _
  $region3: #{tile.23} parent=0 // pred_check_branch
    %3 = sbr.rel (0) target = $region5
  $region4: #{tile.23} parent=0 // pred_region
    _
  $region5: #{tile.23} parent=0 // pred_fallthru
    _
  %v4 = vld [vmem:[%s0] ss:$0 sm:$0xff]
  %5 = vst [vmem:[%s1] sm:$0xff] %v4

// kernel: tile.24
$region0: #{tile.24}
  %s0 = inlined_call_operand.vmem [shape: f32[7,16], index: 0, kind: input, shape index: {}]
  %s1 = inlined_call_operand.vmem [shape: f32[1,112], index: 1, kind: output, shape index: {}]
  $region1: #{tile.24} parent=0
    #allocation0 [shape = 'u8[4096]{0}', space=vmem, size = 0x1000, scoped, tag = 'scoped mem for output reshape']
    %v2 = vld [vmem:[%s0] sm:$0x1]
    %vm3 = vcmask 130048
    %4 = vst.msk [vmem:[#allocation0] sm:$0x1] %vm3, %v2
    %s5 = scalar_lea.vmem %s0, 6
    %v6 = vld [vmem:[%s5] sm:$0x1]
    %7 = vrot.lane.b32.xlu0 %v6, 96
    %v8 = vpop.permute.xlu0 %7
    %vm9 = vcmask 917248
    %10 = vst.msk [vmem:[#allocation0] sm:$0x1] %vm9, %v8
    %s11 = scalar_lea.vmem %s0, 5
    %v12 = vld [vmem:[%s11] sm:$0x1]
    %13 = vrot.lane.b32.xlu0 %v12, 80
    %v14 = vpop.permute.xlu0 %13
    %vm15 = vcmask 786048
    %16 = vst.msk [vmem:[#allocation0] sm:$0x1] %vm15, %v14
    %s17 = scalar_lea.vmem %s0, 4
    %v18 = vld [vmem:[%s17] sm:$0x1]
    %19 = vrot.lane.b32.xlu0 %v18, 64
    %v20 = vpop.permute.xlu0 %19
    %vm21 = vcmask 654848
    %22 = vst.msk [vmem:[#allocation0] sm:$0x1] %vm21, %v20
    %s23 = scalar_lea.vmem %s0, 3
    %v24 = vld [vmem:[%s23] sm:$0x1]
    %25 = vrot.lane.b32.xlu0 %v24, 48
    %v26 = vpop.permute.xlu0 %25
    %vm27 = vcmask 523648
    %28 = vst.msk [vmem:[#allocation0] sm:$0x1] %vm27, %v26
    %s29 = scalar_lea.vmem %s0, 2
    %v30 = vld [vmem:[%s29] sm:$0x1]
    %31 = vrot.lane.b32.xlu0 %v30, 32
    %v32 = vpop.permute.xlu0 %31
    %vm33 = vcmask 392448
    %34 = vst.msk [vmem:[#allocation0] sm:$0x1] %vm33, %v32
    %s35 = scalar_lea.vmem %s0, 1
    %v36 = vld [vmem:[%s35] sm:$0x1]
    %37 = vrot.lane.b32.xlu0 %v36, 16
    %v38 = vpop.permute.xlu0 %37
    %vm39 = vcmask 261248
    %40 = vst.msk [vmem:[#allocation0] sm:$0x1] %vm39, %v38
    %s42 = ssub.s32 2, 1
    %v43 = vld [vmem:[#allocation0] sm:%s42]
    %s45 = ssub.s32 2, 1
    %46 = vst [vmem:[%s1] sm:%s45] %v43

// kernel: tile.28
$region0: #{tile.28}
  #allocation0 [shape = 's32[1]{0}', space=sflag, size = 0x4, scoped, tag = 'scoped memory for tile.28']
  %s0 = inlined_call_operand.vmem [shape: f32[10], index: 0, kind: input, shape index: {}]
  %s1 = inlined_call_operand.vmem [shape: f32[4,10], index: 1, kind: output, shape index: {}]
  // Predicated region
  $region2: #{tile.28} parent=0 // pred_check
    _
  $region3: #{tile.28} parent=0 // pred_check_branch
    %3 = sbr.rel (0) target = $region5
  $region4: #{tile.28} parent=0 // pred_region
    _
  $region5: #{tile.28} parent=0 // pred_fallthru
    _
  %v4 = vld [vmem:[%s0] ss:$0 sm:$0xff]
  %5 = vst [vmem:[%s1] sm:$0xf] %v4

// kernel: tile.29
$region0: #{tile.29}
  %s0 = inlined_call_operand.vmem [shape: f32[4,10], index: 0, kind: input, shape index: {}]
  %s1 = inlined_call_operand.vmem [shape: f32[1,40], index: 1, kind: output, shape index: {}]
  $region1: #{tile.29} parent=0
    #allocation0 [shape = 'u8[4096]{0}', space=vmem, size = 0x1000, scoped, tag = 'scoped mem for output reshape']
    #allocation1 [shape = 'u8[4096]{0}', space=vmem, size = 0x1000, scoped, tag = 'scoped mem for input reshape']
    %s3 = ssub.s32 16, 1
    %v4 = vld [vmem:[%s0] sm:%s3]
    %5 = vst [vmem:[#allocation1] sm:%s3] %v4
    %v6 = vld [vmem:[#allocation1] sm:$0x1]
    %vm7 = vcmask 80896
    %8 = vst.msk [vmem:[#allocation0] sm:$0x1] %vm7, %v6
    %s9 = scalar_lea.vmem [#allocation1], 3
    %v10 = vld [vmem:[%s9] sm:$0x1]
    %11 = vrot.lane.b32.xlu0 %v10, 30
    %v12 = vpop.permute.xlu0 %11
    %vm13 = vcmask 326896
    %14 = vst.msk [vmem:[#allocation0] sm:$0x1] %vm13, %v12
    %s15 = scalar_lea.vmem [#allocation1], 2
    %v16 = vld [vmem:[%s15] sm:$0x1]
    %17 = vrot.lane.b32.xlu0 %v16, 20
    %v18 = vpop.permute.xlu0 %17
    %vm19 = vcmask 244896
    %20 = vst.msk [vmem:[#allocation0] sm:$0x1] %vm19, %v18
    %s21 = scalar_lea.vmem [#allocation1], 1
    %v22 = vld [vmem:[%s21] sm:$0x1]
    %23 = vrot.lane.b32.xlu0 %v22, 10
    %v24 = vpop.permute.xlu0 %23
    %vm25 = vcmask 162896
    %26 = vst.msk [vmem:[#allocation0] sm:$0x1] %vm25, %v24
    %s28 = ssub.s32 2, 1
    %v29 = vld [vmem:[#allocation0] sm:%s28]
    %s31 = ssub.s32 2, 1
    %32 = vst [vmem:[%s1] sm:%s31] %v29

// kernel: mnist_cnn_forward.1
$region0: #{mnist_cnn_forward.1}
  #allocation0 [shape = 'u32[]', space=smem, size = 0x4, offset = 0x4, fixed_abs, tag = 'smem constant byte address 0x4 - core index']
  #allocation1 [shape = 'u32[72,128]{1,0:T(1,128)}', space=vmem, size = 0x9000, scoped, tag = 'internal scratch']
  #allocation2 [shape = 'f32[15,8,224]{2,1,0:T(8,128)}', space=vmem, size = 0x1e000, scoped, tag = 'scratch operand']
  #allocation3 [shape = 'f32[9,8,112]{2,1,0:T(8,128)}', space=vmem, size = 0x9000, scoped, tag = 'scratch operand']
  %s0 = inlined_call_operand.vmem [shape: f32[29,8,28], index: 0, kind: input, shape index: {}]
  %s1 = inlined_call_operand.vmem [shape: f32[3,28,224], index: 1, kind: input, shape index: {}]
  %s2 = inlined_call_operand.vmem [shape: f32[1,224], index: 2, kind: input, shape index: {}]
  %s3 = inlined_call_operand.vmem [shape: f32[3,224,112], index: 3, kind: input, shape index: {}]
  %s4 = inlined_call_operand.vmem [shape: f32[1,112], index: 4, kind: input, shape index: {}]
  %s5 = inlined_call_operand.vmem [shape: f32[3,112,40], index: 5, kind: input, shape index: {}]
  %s6 = inlined_call_operand.vmem [shape: f32[1,40], index: 6, kind: input, shape index: {}]
  %s7 = inlined_call_operand.vmem [shape: f32[40,10], index: 7, kind: input, shape index: {}]
  %s8 = inlined_call_operand.vmem [shape: f32[8,10], index: 8, kind: output, shape index: {}]
  %s9 = sld [smem:[#allocation0]]
  $region42: #{mnist_cnn_forward.1} parent=0
    _
  %s11 = ssub.s32 1, %s9
  %s12 = scalar_select 0, %s11, %s9
  // Predicated region
  $region2: #{mnist_cnn_forward.1} parent=0 // pred_check
    _
  $region3: #{mnist_cnn_forward.1} parent=0 // pred_check_branch
    %14 = sbr.rel (0) target = $region5
  $region4: #{mnist_cnn_forward.1} parent=0 // pred_region
    _
  $region5: #{mnist_cnn_forward.1} parent=0 // pred_fallthru
    _
  // Predicated region
  $region6: #{mnist_cnn_forward.1} parent=0 // pred_check
    _
  $region7: #{mnist_cnn_forward.1} parent=0 // pred_check_branch
    %16 = sbr.rel (0) target = $region9
  $region8: #{mnist_cnn_forward.1} parent=0 // pred_region
    _
  $region9: #{mnist_cnn_forward.1} parent=0 // pred_fallthru
    _
  // Predicated region
  $region10: #{mnist_cnn_forward.1} parent=0 // pred_check
    _
  $region11: #{mnist_cnn_forward.1} parent=0 // pred_check_branch
    %18 = sbr.rel (0) target = $region13
  $region12: #{mnist_cnn_forward.1} parent=0 // pred_region
    _
  $region13: #{mnist_cnn_forward.1} parent=0 // pred_fallthru
    _
  // Predicated region
  $region14: #{mnist_cnn_forward.1} parent=0 // pred_check
    _
  $region15: #{mnist_cnn_forward.1} parent=0 // pred_check_branch
    %20 = sbr.rel (0) target = $region17
  $region16: #{mnist_cnn_forward.1} parent=0 // pred_region
    _
  $region17: #{mnist_cnn_forward.1} parent=0 // pred_fallthru
    _
  // Predicated region
  $region18: #{mnist_cnn_forward.1} parent=0 // pred_check
    _
  $region19: #{mnist_cnn_forward.1} parent=0 // pred_check_branch
    %22 = sbr.rel (0) target = $region21
  $region20: #{mnist_cnn_forward.1} parent=0 // pred_region
    _
  $region21: #{mnist_cnn_forward.1} parent=0 // pred_fallthru
    _
  // Predicated region
  $region22: #{mnist_cnn_forward.1} parent=0 // pred_check
    _
  $region23: #{mnist_cnn_forward.1} parent=0 // pred_check_branch
    %24 = sbr.rel (0) target = $region25
  $region24: #{mnist_cnn_forward.1} parent=0 // pred_region
    _
  $region25: #{mnist_cnn_forward.1} parent=0 // pred_fallthru
    _
  // Predicated region
  $region26: #{mnist_cnn_forward.1} parent=0 // pred_check
    _
  $region27: #{mnist_cnn_forward.1} parent=0 // pred_check_branch
    %26 = sbr.rel (0) target = $region29
  $region28: #{mnist_cnn_forward.1} parent=0 // pred_region
    _
  $region29: #{mnist_cnn_forward.1} parent=0 // pred_fallthru
    _
  // Predicated region
  $region30: #{mnist_cnn_forward.1} parent=0 // pred_check
    _
  $region31: #{mnist_cnn_forward.1} parent=0 // pred_check_branch
    %28 = sbr.rel (0) target = $region33
  $region32: #{mnist_cnn_forward.1} parent=0 // pred_region
    _
  $region33: #{mnist_cnn_forward.1} parent=0 // pred_fallthru
    _
  %v29 = vld [vmem:[%s0] sm:$0xff]
  %s30 = scalar_lea.vmem %s0, 16
  %v31 = vld [vmem:[%s30] sm:$0xff]
  %s32 = scalar_lea.vmem %s0, 32
  %v33 = vld [vmem:[%s32] sm:$0xff]
  %s34 = scalar_lea.vmem %s0, 48
  %v35 = vld [vmem:[%s34] sm:$0xff]
  %s36 = scalar_lea.vmem %s0, 64
  %v37 = vld [vmem:[%s36] sm:$0xff]
  %s38 = scalar_lea.vmem %s0, 80
  %v39 = vld [vmem:[%s38] sm:$0xff]
  %s40 = scalar_lea.vmem %s0, 96
  %v41 = vld [vmem:[%s40] sm:$0xff]
  %s42 = scalar_lea.vmem %s0, 112
  %v43 = vld [vmem:[%s42] sm:$0xff]
  %s44 = scalar_lea.vmem %s0, 128
  %v45 = vld [vmem:[%s44] sm:$0xff]
  %s46 = scalar_lea.vmem %s0, 144
  %v47 = vld [vmem:[%s46] sm:$0xff]
  %s48 = scalar_lea.vmem %s0, 160
  %v49 = vld [vmem:[%s48] sm:$0xff]
  %s50 = scalar_lea.vmem %s0, 176
  %v51 = vld [vmem:[%s50] sm:$0xff]
  %s52 = scalar_lea.vmem %s0, 192
  %v53 = vld [vmem:[%s52] sm:$0xff]
  %s54 = scalar_lea.vmem %s0, 208
  %v55 = vld [vmem:[%s54] sm:$0xff]
  %v56 = vld [vmem:[%s1] sm:$0xff]
  %v57 = vld [vmem:[%s1 + $0x8] sm:$0xff]
  %v58 = vld [vmem:[%s1 + $0x10] sm:$0xff]
  %v59 = vld [vmem:[%s1 + $0x18] sm:$0xff]
  %v60 = vld [vmem:[%s1 + $0x20] sm:$0xff]
  %v61 = vld [vmem:[%s1 + $0x28] sm:$0xff]
  %v62 = vld [vmem:[%s1 + $0x30] sm:$0xf]
  %v63 = vld [vmem:[%s1 + $0x38] sm:$0xf]
  %s64 = scalar_lea.vmem %s0, 8
  %v65 = vld [vmem:[%s64] sm:$0xff]
  %s66 = scalar_lea.vmem %s0, 24
  %v67 = vld [vmem:[%s66] sm:$0xff]
  %s68 = scalar_lea.vmem %s0, 40
  %v69 = vld [vmem:[%s68] sm:$0xff]
  %s70 = scalar_lea.vmem %s0, 56
  %v71 = vld [vmem:[%s70] sm:$0xff]
  %s72 = scalar_lea.vmem %s0, 72
  %v73 = vld [vmem:[%s72] sm:$0xff]
  %s74 = scalar_lea.vmem %s0, 88
  %v75 = vld [vmem:[%s74] sm:$0xff]
  %s76 = scalar_lea.vmem %s0, 104
  %v77 = vld [vmem:[%s76] sm:$0xff]
  %s78 = scalar_lea.vmem %s0, 120
  %v79 = vld [vmem:[%s78] sm:$0xff]
  %s80 = scalar_lea.vmem %s0, 136
  %v81 = vld [vmem:[%s80] sm:$0xff]
  %s82 = scalar_lea.vmem %s0, 152
  %v83 = vld [vmem:[%s82] sm:$0xff]
  %s84 = scalar_lea.vmem %s0, 168
  %v85 = vld [vmem:[%s84] sm:$0xff]
  %s86 = scalar_lea.vmem %s0, 184
  %v87 = vld [vmem:[%s86] sm:$0xff]
  %s88 = scalar_lea.vmem %s0, 200
  %v89 = vld [vmem:[%s88] sm:$0xff]
  %s90 = scalar_lea.vmem %s0, 216
  %v91 = vld [vmem:[%s90] sm:$0xff]
  %s92 = scalar_lea.vmem %s1, 64
  %v93 = vld [vmem:[%s92] sm:$0xff]
  %v94 = vld [vmem:[%s92 + $0x8] sm:$0xff]
  %v95 = vld [vmem:[%s92 + $0x10] sm:$0xff]
  %v96 = vld [vmem:[%s92 + $0x18] sm:$0xff]
  %v97 = vld [vmem:[%s92 + $0x20] sm:$0xff]
  %v98 = vld [vmem:[%s92 + $0x28] sm:$0xff]
  %v99 = vld [vmem:[%s92 + $0x30] sm:$0xf]
  %v100 = vld [vmem:[%s92 + $0x38] sm:$0xf]
  %vm101 = vcmask 228352
  %v103 = vsel %vm101, %v65, 0
  %v106 = vsel %vm101, %v67, 0
  %v109 = vsel %vm101, %v69, 0
  %v112 = vsel %vm101, %v71, 0
  %v115 = vsel %vm101, %v73, 0
  %v118 = vsel %vm101, %v75, 0
  %v121 = vsel %vm101, %v77, 0
  %v124 = vsel %vm101, %v79, 0
  %v127 = vsel %vm101, %v81, 0
  %v130 = vsel %vm101, %v83, 0
  %v133 = vsel %vm101, %v85, 0
  %v136 = vsel %vm101, %v87, 0
  %v139 = vsel %vm101, %v89, 0
  %v142 = vsel %vm101, %v91, 0
  %vm144 = vcmask 1043456
  %v146 = vsel %vm144, %v99, 0
  %v149 = vsel %vm144, %v100, 0
  %151 = vmatpush.msra.mxu0 0.0
  %152 = vmatpush.msra.mxu0 0.0
  %153 = vmatpush.msra.mxu0 0.0
  %154 = vmatpush.msra.mxu0 0.0
  %155 = vmatpush.msra.mxu0 0.0
  %156 = vmatpush.msra.mxu0 0.0
  %157 = vmatpush.msra.mxu0 0.0
  %158 = vmatpush.msra.mxu0 0.0
  %159 = vmatpush.msra.mxu0 0.0
  %160 = vmatpush.msra.mxu0 0.0
  %161 = vmatpush.msra.mxu0 0.0
  %162 = vmatpush.msra.mxu0 0.0
  %163 = vmatpush.msra.mxu0 %v146
  %164 = vmatpush.msra.mxu0 %v97
  %165 = vmatpush.msra.mxu0 %v95
  %166 = vmatpush.msra.mxu0 %v93
  %167 = vmatmul.f32.gmra.mxu0 %v103
  %v168 = vpop.f32.mrf.mxu0
  %v169 = vadd.f32 0.0, %v168
  %170 = vmatmul.f32.gmra.mxu0 %v106
  %v171 = vpop.f32.mrf.mxu0
  %v172 = vadd.f32 0.0, %v171
  %173 = vmatmul.f32.gmra.mxu0 %v109
  %v174 = vpop.f32.mrf.mxu0
  %v175 = vadd.f32 0.0, %v174
  %176 = vmatmul.f32.gmra.mxu0 %v112
  %v177 = vpop.f32.mrf.mxu0
  %v178 = vadd.f32 0.0, %v177
  %179 = vmatmul.f32.gmra.mxu0 %v115
  %v180 = vpop.f32.mrf.mxu0
  %v181 = vadd.f32 0.0, %v180
  %182 = vmatmul.f32.gmra.mxu0 %v118
  %v183 = vpop.f32.mrf.mxu0
  %v184 = vadd.f32 0.0, %v183
  %185 = vmatmul.f32.gmra.mxu0 %v121
  %v186 = vpop.f32.mrf.mxu0
  %v187 = vadd.f32 0.0, %v186
  %188 = vmatmul.f32.gmra.mxu0 %v124
  %v189 = vpop.f32.mrf.mxu0
  %v190 = vadd.f32 0.0, %v189
  %191 = vmatmul.f32.gmra.mxu0 %v127
  %v192 = vpop.f32.mrf.mxu0
  %v193 = vadd.f32 0.0, %v192
  %194 = vmatmul.f32.gmra.mxu0 %v130
  %v195 = vpop.f32.mrf.mxu0
  %v196 = vadd.f32 0.0, %v195
  %197 = vmatmul.f32.gmra.mxu0 %v133
  %v198 = vpop.f32.mrf.mxu0
  %v199 = vadd.f32 0.0, %v198
  %200 = vmatmul.f32.gmra.mxu0 %v136
  %v201 = vpop.f32.mrf.mxu0
  %v202 = vadd.f32 0.0, %v201
  %203 = vmatmul.f32.gmra.mxu0 %v139
  %v204 = vpop.f32.mrf.mxu0
  %v205 = vadd.f32 0.0, %v204
  %206 = vmatmul.f32.gmra.mxu0 %v142
  %v207 = vpop.f32.mrf.mxu0
  %v208 = vadd.f32 0.0, %v207
  %209 = vdwg.mxu0
  %210 = vmatpush.msra.mxu0 0.0
  %211 = vmatpush.msra.mxu0 0.0
  %212 = vmatpush.msra.mxu0 0.0
  %213 = vmatpush.msra.mxu0 0.0
  %214 = vmatpush.msra.mxu0 0.0
  %215 = vmatpush.msra.mxu0 0.0
  %216 = vmatpush.msra.mxu0 0.0
  %217 = vmatpush.msra.mxu0 0.0
  %218 = vmatpush.msra.mxu0 0.0
  %219 = vmatpush.msra.mxu0 0.0
  %220 = vmatpush.msra.mxu0 0.0
  %221 = vmatpush.msra.mxu0 0.0
  %222 = vmatpush.msra.mxu0 %v149
  %223 = vmatpush.msra.mxu0 %v98
  %224 = vmatpush.msra.mxu0 %v96
  %225 = vmatpush.msra.mxu0 %v94
  %226 = vmatmul.f32.gmra.mxu0 %v103
  %v227 = vpop.f32.mrf.mxu0
  %v228 = vadd.f32 0.0, %v227
  %229 = vmatmul.f32.gmra.mxu0 %v106
  %v230 = vpop.f32.mrf.mxu0
  %v231 = vadd.f32 0.0, %v230
  %232 = vmatmul.f32.gmra.mxu0 %v109
  %v233 = vpop.f32.mrf.mxu0
  %v234 = vadd.f32 0.0, %v233
  %235 = vmatmul.f32.gmra.mxu0 %v112
  %v236 = vpop.f32.mrf.mxu0
  %v237 = vadd.f32 0.0, %v236
  %238 = vmatmul.f32.gmra.mxu0 %v115
  %v239 = vpop.f32.mrf.mxu0
  %v240 = vadd.f32 0.0, %v239
  %241 = vmatmul.f32.gmra.mxu0 %v118
  %v242 = vpop.f32.mrf.mxu0
  %v243 = vadd.f32 0.0, %v242
  %244 = vmatmul.f32.gmra.mxu0 %v121
  %v245 = vpop.f32.mrf.mxu0
  %v246 = vadd.f32 0.0, %v245
  %247 = vmatmul.f32.gmra.mxu0 %v124
  %v248 = vpop.f32.mrf.mxu0
  %v249 = vadd.f32 0.0, %v248
  %250 = vmatmul.f32.gmra.mxu0 %v127
  %v251 = vpop.f32.mrf.mxu0
  %v252 = vadd.f32 0.0, %v251
  %253 = vmatmul.f32.gmra.mxu0 %v130
  %v254 = vpop.f32.mrf.mxu0
  %v255 = vadd.f32 0.0, %v254
  %256 = vmatmul.f32.gmra.mxu0 %v133
  %v257 = vpop.f32.mrf.mxu0
  %v258 = vadd.f32 0.0, %v257
  %259 = vmatmul.f32.gmra.mxu0 %v136
  %v260 = vpop.f32.mrf.mxu0
  %v261 = vadd.f32 0.0, %v260
  %262 = vmatmul.f32.gmra.mxu0 %v139
  %v263 = vpop.f32.mrf.mxu0
  %v264 = vadd.f32 0.0, %v263
  %265 = vmatmul.f32.gmra.mxu0 %v142
  %v266 = vpop.f32.mrf.mxu0
  %v267 = vadd.f32 0.0, %v266
  %268 = vdwg.mxu0
  %v270 = vsel %vm101, %v29, 0
  %v273 = vsel %vm101, %v31, 0
  %v276 = vsel %vm101, %v33, 0
  %v279 = vsel %vm101, %v35, 0
  %v282 = vsel %vm101, %v37, 0
  %v285 = vsel %vm101, %v39, 0
  %v288 = vsel %vm101, %v41, 0
  %v291 = vsel %vm101, %v43, 0
  %v294 = vsel %vm101, %v45, 0
  %v297 = vsel %vm101, %v47, 0
  %v300 = vsel %vm101, %v49, 0
  %v303 = vsel %vm101, %v51, 0
  %v306 = vsel %vm101, %v53, 0
  %v309 = vsel %vm101, %v55, 0
  %v312 = vsel %vm144, %v62, 0
  %v315 = vsel %vm144, %v63, 0
  %317 = vmatpush.msra.mxu0 0.0
  %318 = vmatpush.msra.mxu0 0.0
  %319 = vmatpush.msra.mxu0 0.0
  %320 = vmatpush.msra.mxu0 0.0
  %321 = vmatpush.msra.mxu0 0.0
  %322 = vmatpush.msra.mxu0 0.0
  %323 = vmatpush.msra.mxu0 0.0
  %324 = vmatpush.msra.mxu0 0.0
  %325 = vmatpush.msra.mxu0 0.0
  %326 = vmatpush.msra.mxu0 0.0
  %327 = vmatpush.msra.mxu0 0.0
  %328 = vmatpush.msra.mxu0 0.0
  %329 = vmatpush.msra.mxu0 %v312
  %330 = vmatpush.msra.mxu0 %v60
  %331 = vmatpush.msra.mxu0 %v58
  %332 = vmatpush.msra.mxu0 %v56
  %333 = vmatmul.f32.gmra.mxu0 %v270
  %v334 = vpop.f32.mrf.mxu0
  %v335 = vadd.f32 %v169, %v334
  %336 = vmatmul.f32.gmra.mxu0 %v273
  %v337 = vpop.f32.mrf.mxu0
  %v338 = vadd.f32 %v172, %v337
  %339 = vmatmul.f32.gmra.mxu0 %v276
  %v340 = vpop.f32.mrf.mxu0
  %v341 = vadd.f32 %v175, %v340
  %342 = vmatmul.f32.gmra.mxu0 %v279
  %v343 = vpop.f32.mrf.mxu0
  %v344 = vadd.f32 %v178, %v343
  %345 = vmatmul.f32.gmra.mxu0 %v282
  %v346 = vpop.f32.mrf.mxu0
  %v347 = vadd.f32 %v181, %v346
  %348 = vmatmul.f32.gmra.mxu0 %v285
  %v349 = vpop.f32.mrf.mxu0
  %v350 = vadd.f32 %v184, %v349
  %351 = vmatmul.f32.gmra.mxu0 %v288
  %v352 = vpop.f32.mrf.mxu0
  %v353 = vadd.f32 %v187, %v352
  %354 = vmatmul.f32.gmra.mxu0 %v291
  %v355 = vpop.f32.mrf.mxu0
  %v356 = vadd.f32 %v190, %v355
  %357 = vmatmul.f32.gmra.mxu0 %v294
  %v358 = vpop.f32.mrf.mxu0
  %v359 = vadd.f32 %v193, %v358
  %360 = vmatmul.f32.gmra.mxu0 %v297
  %v361 = vpop.f32.mrf.mxu0
  %v362 = vadd.f32 %v196, %v361
  %363 = vmatmul.f32.gmra.mxu0 %v300
  %v364 = vpop.f32.mrf.mxu0
  %v365 = vadd.f32 %v199, %v364
  %366 = vmatmul.f32.gmra.mxu0 %v303
  %v367 = vpop.f32.mrf.mxu0
  %v368 = vadd.f32 %v202, %v367
  %369 = vmatmul.f32.gmra.mxu0 %v306
  %v370 = vpop.f32.mrf.mxu0
  %v371 = vadd.f32 %v205, %v370
  %372 = vmatmul.f32.gmra.mxu0 %v309
  %v373 = vpop.f32.mrf.mxu0
  %v374 = vadd.f32 %v208, %v373
  %375 = vdwg.mxu0
  %376 = vmatpush.msra.mxu0 0.0
  %377 = vmatpush.msra.mxu0 0.0
  %378 = vmatpush.msra.mxu0 0.0
  %379 = vmatpush.msra.mxu0 0.0
  %380 = vmatpush.msra.mxu0 0.0
  %381 = vmatpush.msra.mxu0 0.0
  %382 = vmatpush.msra.mxu0 0.0
  %383 = vmatpush.msra.mxu0 0.0
  %384 = vmatpush.msra.mxu0 0.0
  %385 = vmatpush.msra.mxu0 0.0
  %386 = vmatpush.msra.mxu0 0.0
  %387 = vmatpush.msra.mxu0 0.0
  %388 = vmatpush.msra.mxu0 %v315
  %389 = vmatpush.msra.mxu0 %v61
  %390 = vmatpush.msra.mxu0 %v59
  %391 = vmatpush.msra.mxu0 %v57
  %392 = vmatmul.f32.gmra.mxu0 %v270
  %v393 = vpop.f32.mrf.mxu0
  %v394 = vadd.f32 %v228, %v393
  %395 = vmatmul.f32.gmra.mxu0 %v273
  %v396 = vpop.f32.mrf.mxu0
  %v397 = vadd.f32 %v231, %v396
  %398 = vmatmul.f32.gmra.mxu0 %v276
  %v399 = vpop.f32.mrf.mxu0
  %v400 = vadd.f32 %v234, %v399
  %401 = vmatmul.f32.gmra.mxu0 %v279
  %v402 = vpop.f32.mrf.mxu0
  %v403 = vadd.f32 %v237, %v402
  %404 = vmatmul.f32.gmra.mxu0 %v282
  %v405 = vpop.f32.mrf.mxu0
  %v406 = vadd.f32 %v240, %v405
  %407 = vmatmul.f32.gmra.mxu0 %v285
  %v408 = vpop.f32.mrf.mxu0
  %v409 = vadd.f32 %v243, %v408
  %410 = vmatmul.f32.gmra.mxu0 %v288
  %v411 = vpop.f32.mrf.mxu0
  %v412 = vadd.f32 %v246, %v411
  %413 = vmatmul.f32.gmra.mxu0 %v291
  %v414 = vpop.f32.mrf.mxu0
  %v415 = vadd.f32 %v249, %v414
  %416 = vmatmul.f32.gmra.mxu0 %v294
  %v417 = vpop.f32.mrf.mxu0
  %v418 = vadd.f32 %v252, %v417
  %419 = vmatmul.f32.gmra.mxu0 %v297
  %v420 = vpop.f32.mrf.mxu0
  %v421 = vadd.f32 %v255, %v420
  %422 = vmatmul.f32.gmra.mxu0 %v300
  %v423 = vpop.f32.mrf.mxu0
  %v424 = vadd.f32 %v258, %v423
  %425 = vmatmul.f32.gmra.mxu0 %v303
  %v426 = vpop.f32.mrf.mxu0
  %v427 = vadd.f32 %v261, %v426
  %428 = vmatmul.f32.gmra.mxu0 %v306
  %v429 = vpop.f32.mrf.mxu0
  %v430 = vadd.f32 %v264, %v429
  %431 = vmatmul.f32.gmra.mxu0 %v309
  %v432 = vpop.f32.mrf.mxu0
  %v433 = vadd.f32 %v267, %v432
  %434 = vdwg.mxu0
  %s435 = scalar_lea.vmem %s0, 224
  %v436 = vld [vmem:[%s435] sm:$0xff]
  %s437 = scalar_lea.vmem %s1, 128
  %v438 = vld [vmem:[%s437] sm:$0xff]
  %v439 = vld [vmem:[%s437 + $0x8] sm:$0xff]
  %v440 = vld [vmem:[%s437 + $0x10] sm:$0xff]
  %v441 = vld [vmem:[%s437 + $0x18] sm:$0xff]
  %v442 = vld [vmem:[%s437 + $0x20] sm:$0xff]
  %v443 = vld [vmem:[%s437 + $0x28] sm:$0xff]
  %v444 = vld [vmem:[%s437 + $0x30] sm:$0xf]
  %v445 = vld [vmem:[%s437 + $0x38] sm:$0xf]
  %v447 = vsel %vm101, %v436, 0
  %v450 = vsel %vm144, %v444, 0
  %v453 = vsel %vm144, %v445, 0
  %455 = vmatpush.msra.mxu0 0.0
  %456 = vmatpush.msra.mxu0 0.0
  %457 = vmatpush.msra.mxu0 0.0
  %458 = vmatpush.msra.mxu0 0.0
  %459 = vmatpush.msra.mxu0 0.0
  %460 = vmatpush.msra.mxu0 0.0
  %461 = vmatpush.msra.mxu0 0.0
  %462 = vmatpush.msra.mxu0 0.0
  %463 = vmatpush.msra.mxu0 0.0
  %464 = vmatpush.msra.mxu0 0.0
  %465 = vmatpush.msra.mxu0 0.0
  %466 = vmatpush.msra.mxu0 0.0
  %467 = vmatpush.msra.mxu0 %v450
  %468 = vmatpush.msra.mxu0 %v442
  %469 = vmatpush.msra.mxu0 %v440
  %470 = vmatpush.msra.mxu0 %v438
  %471 = vmatmul.f32.gmra.mxu0 %v273
  %v472 = vpop.f32.mrf.mxu0
  %v473 = vadd.f32 0.0, %v472
  %474 = vmatmul.f32.gmra.mxu0 %v276
  %v475 = vpop.f32.mrf.mxu0
  %v476 = vadd.f32 0.0, %v475
  %477 = vmatmul.f32.gmra.mxu0 %v279
  %v478 = vpop.f32.mrf.mxu0
  %v479 = vadd.f32 0.0, %v478
  %480 = vmatmul.f32.gmra.mxu0 %v282
  %v481 = vpop.f32.mrf.mxu0
  %v482 = vadd.f32 0.0, %v481
  %483 = vmatmul.f32.gmra.mxu0 %v285
  %v484 = vpop.f32.mrf.mxu0
  %v485 = vadd.f32 0.0, %v484
  %486 = vmatmul.f32.gmra.mxu0 %v288
  %v487 = vpop.f32.mrf.mxu0
  %v488 = vadd.f32 0.0, %v487
  %489 = vmatmul.f32.gmra.mxu0 %v291
  %v490 = vpop.f32.mrf.mxu0
  %v491 = vadd.f32 0.0, %v490
  %492 = vmatmul.f32.gmra.mxu0 %v294
  %v493 = vpop.f32.mrf.mxu0
  %v494 = vadd.f32 0.0, %v493
  %495 = vmatmul.f32.gmra.mxu0 %v297
  %v496 = vpop.f32.mrf.mxu0
  %v497 = vadd.f32 0.0, %v496
  %498 = vmatmul.f32.gmra.mxu0 %v300
  %v499 = vpop.f32.mrf.mxu0
  %v500 = vadd.f32 0.0, %v499
  %501 = vmatmul.f32.gmra.mxu0 %v303
  %v502 = vpop.f32.mrf.mxu0
  %v503 = vadd.f32 0.0, %v502
  %504 = vmatmul.f32.gmra.mxu0 %v306
  %v505 = vpop.f32.mrf.mxu0
  %v506 = vadd.f32 0.0, %v505
  %507 = vmatmul.f32.gmra.mxu0 %v309
  %v508 = vpop.f32.mrf.mxu0
  %v509 = vadd.f32 0.0, %v508
  %510 = vmatmul.f32.gmra.mxu0 %v447
  %v511 = vpop.f32.mrf.mxu0
  %v512 = vadd.f32 0.0, %v511
  %513 = vdwg.mxu0
  %514 = vmatpush.msra.mxu0 0.0
  %515 = vmatpush.msra.mxu0 0.0
  %516 = vmatpush.msra.mxu0 0.0
  %517 = vmatpush.msra.mxu0 0.0
  %518 = vmatpush.msra.mxu0 0.0
  %519 = vmatpush.msra.mxu0 0.0
  %520 = vmatpush.msra.mxu0 0.0
  %521 = vmatpush.msra.mxu0 0.0
  %522 = vmatpush.msra.mxu0 0.0
  %523 = vmatpush.msra.mxu0 0.0
  %524 = vmatpush.msra.mxu0 0.0
  %525 = vmatpush.msra.mxu0 0.0
  %526 = vmatpush.msra.mxu0 %v453
  %527 = vmatpush.msra.mxu0 %v443
  %528 = vmatpush.msra.mxu0 %v441
  %529 = vmatpush.msra.mxu0 %v439
  %530 = vmatmul.f32.gmra.mxu0 %v273
  %v531 = vpop.f32.mrf.mxu0
  %v532 = vadd.f32 0.0, %v531
  %533 = vmatmul.f32.gmra.mxu0 %v276
  %v534 = vpop.f32.mrf.mxu0
  %v535 = vadd.f32 0.0, %v534
  %536 = vmatmul.f32.gmra.mxu0 %v279
  %v537 = vpop.f32.mrf.mxu0
  %v538 = vadd.f32 0.0, %v537
  %539 = vmatmul.f32.gmra.mxu0 %v282
  %v540 = vpop.f32.mrf.mxu0
  %v541 = vadd.f32 0.0, %v540
  %542 = vmatmul.f32.gmra.mxu0 %v285
  %v543 = vpop.f32.mrf.mxu0
  %v544 = vadd.f32 0.0, %v543
  %545 = vmatmul.f32.gmra.mxu0 %v288
  %v546 = vpop.f32.mrf.mxu0
  %v547 = vadd.f32 0.0, %v546
  %548 = vmatmul.f32.gmra.mxu0 %v291
  %v549 = vpop.f32.mrf.mxu0
  %v550 = vadd.f32 0.0, %v549
  %551 = vmatmul.f32.gmra.mxu0 %v294
  %v552 = vpop.f32.mrf.mxu0
  %v553 = vadd.f32 0.0, %v552
  %554 = vmatmul.f32.gmra.mxu0 %v297
  %v555 = vpop.f32.mrf.mxu0
  %v556 = vadd.f32 0.0, %v555
  %557 = vmatmul.f32.gmra.mxu0 %v300
  %v558 = vpop.f32.mrf.mxu0
  %v559 = vadd.f32 0.0, %v558
  %560 = vmatmul.f32.gmra.mxu0 %v303
  %v561 = vpop.f32.mrf.mxu0
  %v562 = vadd.f32 0.0, %v561
  %563 = vmatmul.f32.gmra.mxu0 %v306
  %v564 = vpop.f32.mrf.mxu0
  %v565 = vadd.f32 0.0, %v564
  %566 = vmatmul.f32.gmra.mxu0 %v309
  %v567 = vpop.f32.mrf.mxu0
  %v568 = vadd.f32 0.0, %v567
  %569 = vmatmul.f32.gmra.mxu0 %v447
  %v570 = vpop.f32.mrf.mxu0
  %v571 = vadd.f32 0.0, %v570
  %572 = vdwg.mxu0
  %v573 = vadd.f32 %v335, %v473
  %v574 = vadd.f32 %v394, %v532
  %v575 = vadd.f32 %v338, %v476
  %v576 = vadd.f32 %v397, %v535
  %v577 = vadd.f32 %v341, %v479
  %v578 = vadd.f32 %v400, %v538
  %v579 = vadd.f32 %v344, %v482
  %v580 = vadd.f32 %v403, %v541
  %v581 = vadd.f32 %v347, %v485
  %v582 = vadd.f32 %v406, %v544
  %v583 = vadd.f32 %v350, %v488
  %v584 = vadd.f32 %v409, %v547
  %v585 = vadd.f32 %v353, %v491
  %v586 = vadd.f32 %v412, %v550
  %v587 = vadd.f32 %v356, %v494
  %v588 = vadd.f32 %v415, %v553
  %v589 = vadd.f32 %v359, %v497
  %v590 = vadd.f32 %v418, %v556
  %v591 = vadd.f32 %v362, %v500
  %v592 = vadd.f32 %v421, %v559
  %v593 = vadd.f32 %v365, %v503
  %v594 = vadd.f32 %v424, %v562
  %v595 = vadd.f32 %v368, %v506
  %v596 = vadd.f32 %v427, %v565
  %v597 = vadd.f32 %v371, %v509
  %v598 = vadd.f32 %v430, %v568
  %v599 = vadd.f32 %v374, %v512
  %v600 = vadd.f32 %v433, %v571
  %v601 = vld [vmem:[%s2] sm:$0x3]
  %v603 = vperm.slane %v601, 0
  %v604 = vperm.slane %v601, 1
  %v607 = vadd.f32 %v573, %v603
  %v608 = vadd.f32 %v574, %v604
  %v609 = vadd.f32 %v575, %v603
  %v610 = vadd.f32 %v576, %v604
  %v611 = vadd.f32 %v577, %v603
  %v612 = vadd.f32 %v578, %v604
  %v613 = vadd.f32 %v579, %v603
  %v614 = vadd.f32 %v580, %v604
  %v615 = vadd.f32 %v581, %v603
  %v616 = vadd.f32 %v582, %v604
  %v617 = vadd.f32 %v583, %v603
  %v618 = vadd.f32 %v584, %v604
  %v619 = vadd.f32 %v585, %v603
  %v620 = vadd.f32 %v586, %v604
  %v621 = vadd.f32 %v587, %v603
  %v622 = vadd.f32 %v588, %v604
  %v623 = vadd.f32 %v589, %v603
  %v624 = vadd.f32 %v590, %v604
  %v625 = vadd.f32 %v591, %v603
  %v626 = vadd.f32 %v592, %v604
  %v627 = vadd.f32 %v593, %v603
  %v628 = vadd.f32 %v594, %v604
  %v629 = vadd.f32 %v595, %v603
  %v630 = vadd.f32 %v596, %v604
  %v631 = vadd.f32 %v597, %v603
  %v632 = vadd.f32 %v598, %v604
  %v633 = vadd.f32 %v599, %v603
  %v634 = vadd.f32 %v600, %v604
  %v635 = vmax.f32 %v607, 0.0
  %v636 = vmax.f32 %v608, 0.0
  %v637 = vmax.f32 %v609, 0.0
  %v638 = vmax.f32 %v610, 0.0
  %v639 = vmax.f32 %v611, 0.0
  %v640 = vmax.f32 %v612, 0.0
  %v641 = vmax.f32 %v613, 0.0
  %v642 = vmax.f32 %v614, 0.0
  %v643 = vmax.f32 %v615, 0.0
  %v644 = vmax.f32 %v616, 0.0
  %v645 = vmax.f32 %v617, 0.0
  %v646 = vmax.f32 %v618, 0.0
  %v647 = vmax.f32 %v619, 0.0
  %v648 = vmax.f32 %v620, 0.0
  %v649 = vmax.f32 %v621, 0.0
  %v650 = vmax.f32 %v622, 0.0
  %v651 = vmax.f32 %v623, 0.0
  %v652 = vmax.f32 %v624, 0.0
  %v653 = vmax.f32 %v625, 0.0
  %v654 = vmax.f32 %v626, 0.0
  %v655 = vmax.f32 %v627, 0.0
  %v656 = vmax.f32 %v628, 0.0
  %v657 = vmax.f32 %v629, 0.0
  %v658 = vmax.f32 %v630, 0.0
  %v659 = vmax.f32 %v631, 0.0
  %v660 = vmax.f32 %v632, 0.0
  %v661 = vmax.f32 %v633, 0.0
  %v662 = vmax.f32 %v634, 0.0
  %663 = vst [vmem:[#allocation2] sm:$0xff] 0.0
  %vm664 = vcmask 785408
  %665 = vst.msk [vmem:[#allocation2 + $0x8] sm:$0xff] %vm664, 0.0
  %s666 = scalar_lea.vmem [#allocation2], 16
  %667 = vst [vmem:[%s666] sm:$0xff] %v635
  %668 = vst.msk [vmem:[%s666 + $0x8] sm:$0xff] %vm664, %v636
  %s669 = scalar_lea.vmem [#allocation2], 32
  %670 = vst [vmem:[%s669] sm:$0xff] %v637
  %671 = vst.msk [vmem:[%s669 + $0x8] sm:$0xff] %vm664, %v638
  %s672 = scalar_lea.vmem [#allocation2], 48
  %673 = vst [vmem:[%s672] sm:$0xff] %v639
  %674 = vst.msk [vmem:[%s672 + $0x8] sm:$0xff] %vm664, %v640
  %s675 = scalar_lea.vmem [#allocation2], 64
  %676 = vst [vmem:[%s675] sm:$0xff] %v641
  %677 = vst.msk [vmem:[%s675 + $0x8] sm:$0xff] %vm664, %v642
  %s678 = scalar_lea.vmem [#allocation2], 80
  %679 = vst [vmem:[%s678] sm:$0xff] %v643
  %680 = vst.msk [vmem:[%s678 + $0x8] sm:$0xff] %vm664, %v644
  %s681 = scalar_lea.vmem [#allocation2], 96
  %682 = vst [vmem:[%s681] sm:$0xff] %v645
  %683 = vst.msk [vmem:[%s681 + $0x8] sm:$0xff] %vm664, %v646
  %s684 = scalar_lea.vmem [#allocation2], 112
  %685 = vst [vmem:[%s684] sm:$0xff] %v647
  %686 = vst.msk [vmem:[%s684 + $0x8] sm:$0xff] %vm664, %v648
  %s687 = scalar_lea.vmem [#allocation2], 128
  %688 = vst [vmem:[%s687] sm:$0xff] %v649
  %689 = vst.msk [vmem:[%s687 + $0x8] sm:$0xff] %vm664, %v650
  %s690 = scalar_lea.vmem [#allocation2], 144
  %691 = vst [vmem:[%s690] sm:$0xff] %v651
  %692 = vst.msk [vmem:[%s690 + $0x8] sm:$0xff] %vm664, %v652
  %s693 = scalar_lea.vmem [#allocation2], 160
  %694 = vst [vmem:[%s693] sm:$0xff] %v653
  %695 = vst.msk [vmem:[%s693 + $0x8] sm:$0xff] %vm664, %v654
  %s696 = scalar_lea.vmem [#allocation2], 176
  %697 = vst [vmem:[%s696] sm:$0xff] %v655
  %698 = vst.msk [vmem:[%s696 + $0x8] sm:$0xff] %vm664, %v656
  %s699 = scalar_lea.vmem [#allocation2], 192
  %700 = vst [vmem:[%s699] sm:$0xff] %v657
  %701 = vst.msk [vmem:[%s699 + $0x8] sm:$0xff] %vm664, %v658
  %s702 = scalar_lea.vmem [#allocation2], 208
  %703 = vst [vmem:[%s702] sm:$0xff] %v659
  %704 = vst.msk [vmem:[%s702 + $0x8] sm:$0xff] %vm664, %v660
  %s705 = scalar_lea.vmem [#allocation2], 224
  %706 = vst [vmem:[%s705] sm:$0xff] %v661
  %707 = vst.msk [vmem:[%s705 + $0x8] sm:$0xff] %vm664, %v662
  %v708 = vld [vmem:[#allocation2] sm:$0xff]
  %v709 = vld [vmem:[#allocation2 + $0x8] sm:$0xff]
  %v710 = vld [vmem:[%s669] sm:$0xff]
  %v711 = vld [vmem:[%s669 + $0x8] sm:$0xff]
  %v712 = vld [vmem:[%s675] sm:$0xff]
  %v713 = vld [vmem:[%s675 + $0x8] sm:$0xff]
  %v714 = vld [vmem:[%s681] sm:$0xff]
  %v715 = vld [vmem:[%s681 + $0x8] sm:$0xff]
  %v716 = vld [vmem:[%s687] sm:$0xff]
  %v717 = vld [vmem:[%s687 + $0x8] sm:$0xff]
  %v718 = vld [vmem:[%s693] sm:$0xff]
  %v719 = vld [vmem:[%s693 + $0x8] sm:$0xff]
  %v720 = vld [vmem:[%s699] sm:$0xff]
  %v721 = vld [vmem:[%s699 + $0x8] sm:$0xff]
  %v722 = vld [vmem:[%s3] sm:$0xff]
  %v723 = vld [vmem:[%s3 + $0x8] sm:$0xff]
  %v724 = vld [vmem:[%s3 + $0x10] sm:$0xff]
  %v725 = vld [vmem:[%s3 + $0x18] sm:$0xff]
  %v726 = vld [vmem:[%s3 + $0x20] sm:$0xff]
  %v727 = vld [vmem:[%s3 + $0x28] sm:$0xff]
  %v728 = vld [vmem:[%s3 + $0x30] sm:$0xff]
  %v729 = vld [vmem:[%s3 + $0x38] sm:$0xff]
  %v730 = vld [vmem:[%s3 + $0x40] sm:$0xff]
  %v731 = vld [vmem:[%s3 + $0x48] sm:$0xff]
  %v732 = vld [vmem:[%s3 + $0x50] sm:$0xff]
  %v733 = vld [vmem:[%s3 + $0x58] sm:$0xff]
  %v734 = vld [vmem:[%s3 + $0x60] sm:$0xff]
  %v735 = vld [vmem:[%s3 + $0x68] sm:$0xff]
  %v736 = vld [vmem:[%s3 + $0x70] sm:$0xff]
  %v737 = vld [vmem:[%s3 + $0x78] sm:$0xff]
  %v738 = vld [vmem:[%s3 + $0x80] sm:$0xff]
  %v739 = vld [vmem:[%s3 + $0x88] sm:$0xff]
  %v740 = vld [vmem:[%s3 + $0x90] sm:$0xff]
  %v741 = vld [vmem:[%s3 + $0x98] sm:$0xff]
  %v742 = vld [vmem:[%s3 + $0xa0] sm:$0xff]
  %v743 = vld [vmem:[%s3 + $0xa8] sm:$0xff]
  %v744 = vld [vmem:[%s3 + $0xb0] sm:$0xff]
  %v745 = vld [vmem:[%s3 + $0xb8] sm:$0xff]
  %v746 = vld [vmem:[%s3 + $0xc0] sm:$0xff]
  %v747 = vld [vmem:[%s3 + $0xc8] sm:$0xff]
  %v748 = vld [vmem:[%s3 + $0xd0] sm:$0xff]
  %v749 = vld [vmem:[%s3 + $0xd8] sm:$0xff]
  %v750 = vld [vmem:[%s666] sm:$0xff]
  %v751 = vld [vmem:[%s666 + $0x8] sm:$0xff]
  %v752 = vld [vmem:[%s672] sm:$0xff]
  %v753 = vld [vmem:[%s672 + $0x8] sm:$0xff]
  %v754 = vld [vmem:[%s678] sm:$0xff]
  %v755 = vld [vmem:[%s678 + $0x8] sm:$0xff]
  %v756 = vld [vmem:[%s684] sm:$0xff]
  %v757 = vld [vmem:[%s684 + $0x8] sm:$0xff]
  %v758 = vld [vmem:[%s690] sm:$0xff]
  %v759 = vld [vmem:[%s690 + $0x8] sm:$0xff]
  %v760 = vld [vmem:[%s696] sm:$0xff]
  %v761 = vld [vmem:[%s696 + $0x8] sm:$0xff]
  %v762 = vld [vmem:[%s702] sm:$0xff]
  %v763 = vld [vmem:[%s702 + $0x8] sm:$0xff]
  %s764 = scalar_lea.vmem %s3, 224
  %v765 = vld [vmem:[%s764] sm:$0xff]
  %v766 = vld [vmem:[%s764 + $0x8] sm:$0xff]
  %v767 = vld [vmem:[%s764 + $0x10] sm:$0xff]
  %v768 = vld [vmem:[%s764 + $0x18] sm:$0xff]
  %v769 = vld [vmem:[%s764 + $0x20] sm:$0xff]
  %v770 = vld [vmem:[%s764 + $0x28] sm:$0xff]
  %v771 = vld [vmem:[%s764 + $0x30] sm:$0xff]
  %v772 = vld [vmem:[%s764 + $0x38] sm:$0xff]
  %v773 = vld [vmem:[%s764 + $0x40] sm:$0xff]
  %v774 = vld [vmem:[%s764 + $0x48] sm:$0xff]
  %v775 = vld [vmem:[%s764 + $0x50] sm:$0xff]
  %v776 = vld [vmem:[%s764 + $0x58] sm:$0xff]
  %v777 = vld [vmem:[%s764 + $0x60] sm:$0xff]
  %v778 = vld [vmem:[%s764 + $0x68] sm:$0xff]
  %v779 = vld [vmem:[%s764 + $0x70] sm:$0xff]
  %v780 = vld [vmem:[%s764 + $0x78] sm:$0xff]
  %v781 = vld [vmem:[%s764 + $0x80] sm:$0xff]
  %v782 = vld [vmem:[%s764 + $0x88] sm:$0xff]
  %v783 = vld [vmem:[%s764 + $0x90] sm:$0xff]
  %v784 = vld [vmem:[%s764 + $0x98] sm:$0xff]
  %v785 = vld [vmem:[%s764 + $0xa0] sm:$0xff]
  %v786 = vld [vmem:[%s764 + $0xa8] sm:$0xff]
  %v787 = vld [vmem:[%s764 + $0xb0] sm:$0xff]
  %v788 = vld [vmem:[%s764 + $0xb8] sm:$0xff]
  %v789 = vld [vmem:[%s764 + $0xc0] sm:$0xff]
  %v790 = vld [vmem:[%s764 + $0xc8] sm:$0xff]
  %v791 = vld [vmem:[%s764 + $0xd0] sm:$0xff]
  %v792 = vld [vmem:[%s764 + $0xd8] sm:$0xff]
  %v794 = vsel %vm664, %v751, 0
  %v797 = vsel %vm664, %v753, 0
  %v800 = vsel %vm664, %v755, 0
  %v803 = vsel %vm664, %v757, 0
  %v806 = vsel %vm664, %v759, 0
  %v809 = vsel %vm664, %v761, 0
  %v812 = vsel %vm664, %v763, 0
  %814 = vmatpush.msra.mxu0 %v780
  %815 = vmatpush.msra.mxu0 %v779
  %816 = vmatpush.msra.mxu0 %v778
  %817 = vmatpush.msra.mxu0 %v777
  %818 = vmatpush.msra.mxu0 %v776
  %819 = vmatpush.msra.mxu0 %v775
  %820 = vmatpush.msra.mxu0 %v774
  %821 = vmatpush.msra.mxu0 %v773
  %822 = vmatpush.msra.mxu0 %v772
  %823 = vmatpush.msra.mxu0 %v771
  %824 = vmatpush.msra.mxu0 %v770
  %825 = vmatpush.msra.mxu0 %v769
  %826 = vmatpush.msra.mxu0 %v768
  %827 = vmatpush.msra.mxu0 %v767
  %828 = vmatpush.msra.mxu0 %v766
  %829 = vmatpush.msra.mxu0 %v765
  %830 = vmatmul.f32.gmra.mxu0 %v750
  %v831 = vpop.f32.mrf.mxu0
  %v832 = vadd.f32 0.0, %v831
  %833 = vmatmul.f32.gmra.mxu0 %v752
  %v834 = vpop.f32.mrf.mxu0
  %v835 = vadd.f32 0.0, %v834
  %836 = vmatmul.f32.gmra.mxu0 %v754
  %v837 = vpop.f32.mrf.mxu0
  %v838 = vadd.f32 0.0, %v837
  %839 = vmatmul.f32.gmra.mxu0 %v756
  %v840 = vpop.f32.mrf.mxu0
  %v841 = vadd.f32 0.0, %v840
  %842 = vmatmul.f32.gmra.mxu0 %v758
  %v843 = vpop.f32.mrf.mxu0
  %v844 = vadd.f32 0.0, %v843
  %845 = vmatmul.f32.gmra.mxu0 %v760
  %v846 = vpop.f32.mrf.mxu0
  %v847 = vadd.f32 0.0, %v846
  %848 = vmatmul.f32.gmra.mxu0 %v762
  %v849 = vpop.f32.mrf.mxu0
  %v850 = vadd.f32 0.0, %v849
  %851 = vdwg.mxu0
  %852 = vmatpush.msra.mxu0 0.0
  %853 = vmatpush.msra.mxu0 0.0
  %854 = vmatpush.msra.mxu0 0.0
  %855 = vmatpush.msra.mxu0 0.0
  %856 = vmatpush.msra.mxu0 %v792
  %857 = vmatpush.msra.mxu0 %v791
  %858 = vmatpush.msra.mxu0 %v790
  %859 = vmatpush.msra.mxu0 %v789
  %860 = vmatpush.msra.mxu0 %v788
  %861 = vmatpush.msra.mxu0 %v787
  %862 = vmatpush.msra.mxu0 %v786
  %863 = vmatpush.msra.mxu0 %v785
  %864 = vmatpush.msra.mxu0 %v784
  %865 = vmatpush.msra.mxu0 %v783
  %866 = vmatpush.msra.mxu0 %v782
  %867 = vmatpush.msra.mxu0 %v781
  %868 = vmatmul.f32.gmra.mxu0 %v794
  %v869 = vpop.f32.mrf.mxu0
  %v870 = vadd.f32 %v832, %v869
  %871 = vmatmul.f32.gmra.mxu0 %v797
  %v872 = vpop.f32.mrf.mxu0
  %v873 = vadd.f32 %v835, %v872
  %874 = vmatmul.f32.gmra.mxu0 %v800
  %v875 = vpop.f32.mrf.mxu0
  %v876 = vadd.f32 %v838, %v875
  %877 = vmatmul.f32.gmra.mxu0 %v803
  %v878 = vpop.f32.mrf.mxu0
  %v879 = vadd.f32 %v841, %v878
  %880 = vmatmul.f32.gmra.mxu0 %v806
  %v881 = vpop.f32.mrf.mxu0
  %v882 = vadd.f32 %v844, %v881
  %883 = vmatmul.f32.gmra.mxu0 %v809
  %v884 = vpop.f32.mrf.mxu0
  %v885 = vadd.f32 %v847, %v884
  %886 = vmatmul.f32.gmra.mxu0 %v812
  %v887 = vpop.f32.mrf.mxu0
  %v888 = vadd.f32 %v850, %v887
  %889 = vdwg.mxu0
  %v891 = vsel %vm664, %v709, 0
  %v894 = vsel %vm664, %v711, 0
  %v897 = vsel %vm664, %v713, 0
  %v900 = vsel %vm664, %v715, 0
  %v903 = vsel %vm664, %v717, 0
  %v906 = vsel %vm664, %v719, 0
  %v909 = vsel %vm664, %v721, 0
  %911 = vmatpush.msra.mxu0 %v737
  %912 = vmatpush.msra.mxu0 %v736
  %913 = vmatpush.msra.mxu0 %v735
  %914 = vmatpush.msra.mxu0 %v734
  %915 = vmatpush.msra.mxu0 %v733
  %916 = vmatpush.msra.mxu0 %v732
  %917 = vmatpush.msra.mxu0 %v731
  %918 = vmatpush.msra.mxu0 %v730
  %919 = vmatpush.msra.mxu0 %v729
  %920 = vmatpush.msra.mxu0 %v728
  %921 = vmatpush.msra.mxu0 %v727
  %922 = vmatpush.msra.mxu0 %v726
  %923 = vmatpush.msra.mxu0 %v725
  %924 = vmatpush.msra.mxu0 %v724
  %925 = vmatpush.msra.mxu0 %v723
  %926 = vmatpush.msra.mxu0 %v722
  %927 = vmatmul.f32.gmra.mxu0 %v708
  %v928 = vpop.f32.mrf.mxu0
  %v929 = vadd.f32 %v870, %v928
  %930 = vmatmul.f32.gmra.mxu0 %v710
  %v931 = vpop.f32.mrf.mxu0
  %v932 = vadd.f32 %v873, %v931
  %933 = vmatmul.f32.gmra.mxu0 %v712
  %v934 = vpop.f32.mrf.mxu0
  %v935 = vadd.f32 %v876, %v934
  %936 = vmatmul.f32.gmra.mxu0 %v714
  %v937 = vpop.f32.mrf.mxu0
  %v938 = vadd.f32 %v879, %v937
  %939 = vmatmul.f32.gmra.mxu0 %v716
  %v940 = vpop.f32.mrf.mxu0
  %v941 = vadd.f32 %v882, %v940
  %942 = vmatmul.f32.gmra.mxu0 %v718
  %v943 = vpop.f32.mrf.mxu0
  %v944 = vadd.f32 %v885, %v943
  %945 = vmatmul.f32.gmra.mxu0 %v720
  %v946 = vpop.f32.mrf.mxu0
  %v947 = vadd.f32 %v888, %v946
  %948 = vdwg.mxu0
  %949 = vmatpush.msra.mxu0 0.0
  %950 = vmatpush.msra.mxu0 0.0
  %951 = vmatpush.msra.mxu0 0.0
  %952 = vmatpush.msra.mxu0 0.0
  %953 = vmatpush.msra.mxu0 %v749
  %954 = vmatpush.msra.mxu0 %v748
  %955 = vmatpush.msra.mxu0 %v747
  %956 = vmatpush.msra.mxu0 %v746
  %957 = vmatpush.msra.mxu0 %v745
  %958 = vmatpush.msra.mxu0 %v744
  %959 = vmatpush.msra.mxu0 %v743
  %960 = vmatpush.msra.mxu0 %v742
  %961 = vmatpush.msra.mxu0 %v741
  %962 = vmatpush.msra.mxu0 %v740
  %963 = vmatpush.msra.mxu0 %v739
  %964 = vmatpush.msra.mxu0 %v738
  %965 = vmatmul.f32.gmra.mxu0 %v891
  %v966 = vpop.f32.mrf.mxu0
  %v967 = vadd.f32 %v929, %v966
  %968 = vmatmul.f32.gmra.mxu0 %v894
  %v969 = vpop.f32.mrf.mxu0
  %v970 = vadd.f32 %v932, %v969
  %971 = vmatmul.f32.gmra.mxu0 %v897
  %v972 = vpop.f32.mrf.mxu0
  %v973 = vadd.f32 %v935, %v972
  %974 = vmatmul.f32.gmra.mxu0 %v900
  %v975 = vpop.f32.mrf.mxu0
  %v976 = vadd.f32 %v938, %v975
  %977 = vmatmul.f32.gmra.mxu0 %v903
  %v978 = vpop.f32.mrf.mxu0
  %v979 = vadd.f32 %v941, %v978
  %980 = vmatmul.f32.gmra.mxu0 %v906
  %v981 = vpop.f32.mrf.mxu0
  %v982 = vadd.f32 %v944, %v981
  %983 = vmatmul.f32.gmra.mxu0 %v909
  %v984 = vpop.f32.mrf.mxu0
  %v985 = vadd.f32 %v947, %v984
  %986 = vdwg.mxu0
  %v987 = vld [vmem:[%s705] sm:$0xff]
  %v988 = vld [vmem:[%s705 + $0x8] sm:$0xff]
  %s989 = scalar_lea.vmem %s3, 448
  %v990 = vld [vmem:[%s989] sm:$0xff]
  %v991 = vld [vmem:[%s989 + $0x8] sm:$0xff]
  %v992 = vld [vmem:[%s989 + $0x10] sm:$0xff]
  %v993 = vld [vmem:[%s989 + $0x18] sm:$0xff]
  %v994 = vld [vmem:[%s989 + $0x20] sm:$0xff]
  %v995 = vld [vmem:[%s989 + $0x28] sm:$0xff]
  %v996 = vld [vmem:[%s989 + $0x30] sm:$0xff]
  %v997 = vld [vmem:[%s989 + $0x38] sm:$0xff]
  %v998 = vld [vmem:[%s989 + $0x40] sm:$0xff]
  %v999 = vld [vmem:[%s989 + $0x48] sm:$0xff]
  %v1000 = vld [vmem:[%s989 + $0x50] sm:$0xff]
  %v1001 = vld [vmem:[%s989 + $0x58] sm:$0xff]
  %v1002 = vld [vmem:[%s989 + $0x60] sm:$0xff]
  %v1003 = vld [vmem:[%s989 + $0x68] sm:$0xff]
  %v1004 = vld [vmem:[%s989 + $0x70] sm:$0xff]
  %v1005 = vld [vmem:[%s989 + $0x78] sm:$0xff]
  %v1006 = vld [vmem:[%s989 + $0x80] sm:$0xff]
  %v1007 = vld [vmem:[%s989 + $0x88] sm:$0xff]
  %v1008 = vld [vmem:[%s989 + $0x90] sm:$0xff]
  %v1009 = vld [vmem:[%s989 + $0x98] sm:$0xff]
  %v1010 = vld [vmem:[%s989 + $0xa0] sm:$0xff]
  %v1011 = vld [vmem:[%s989 + $0xa8] sm:$0xff]
  %v1012 = vld [vmem:[%s989 + $0xb0] sm:$0xff]
  %v1013 = vld [vmem:[%s989 + $0xb8] sm:$0xff]
  %v1014 = vld [vmem:[%s989 + $0xc0] sm:$0xff]
  %v1015 = vld [vmem:[%s989 + $0xc8] sm:$0xff]
  %v1016 = vld [vmem:[%s989 + $0xd0] sm:$0xff]
  %v1017 = vld [vmem:[%s989 + $0xd8] sm:$0xff]
  %v1019 = vsel %vm664, %v988, 0
  %1021 = vmatpush.msra.mxu0 %v1005
  %1022 = vmatpush.msra.mxu0 %v1004
  %1023 = vmatpush.msra.mxu0 %v1003
  %1024 = vmatpush.msra.mxu0 %v1002
  %1025 = vmatpush.msra.mxu0 %v1001
  %1026 = vmatpush.msra.mxu0 %v1000
  %1027 = vmatpush.msra.mxu0 %v999
  %1028 = vmatpush.msra.mxu0 %v998
  %1029 = vmatpush.msra.mxu0 %v997
  %1030 = vmatpush.msra.mxu0 %v996
  %1031 = vmatpush.msra.mxu0 %v995
  %1032 = vmatpush.msra.mxu0 %v994
  %1033 = vmatpush.msra.mxu0 %v993
  %1034 = vmatpush.msra.mxu0 %v992
  %1035 = vmatpush.msra.mxu0 %v991
  %1036 = vmatpush.msra.mxu0 %v990
  %1037 = vmatmul.f32.gmra.mxu0 %v710
  %v1038 = vpop.f32.mrf.mxu0
  %v1039 = vadd.f32 0.0, %v1038
  %1040 = vmatmul.f32.gmra.mxu0 %v712
  %v1041 = vpop.f32.mrf.mxu0
  %v1042 = vadd.f32 0.0, %v1041
  %1043 = vmatmul.f32.gmra.mxu0 %v714
  %v1044 = vpop.f32.mrf.mxu0
  %v1045 = vadd.f32 0.0, %v1044
  %1046 = vmatmul.f32.gmra.mxu0 %v716
  %v1047 = vpop.f32.mrf.mxu0
  %v1048 = vadd.f32 0.0, %v1047
  %1049 = vmatmul.f32.gmra.mxu0 %v718
  %v1050 = vpop.f32.mrf.mxu0
  %v1051 = vadd.f32 0.0, %v1050
  %1052 = vmatmul.f32.gmra.mxu0 %v720
  %v1053 = vpop.f32.mrf.mxu0
  %v1054 = vadd.f32 0.0, %v1053
  %1055 = vmatmul.f32.gmra.mxu0 %v987
  %v1056 = vpop.f32.mrf.mxu0
  %v1057 = vadd.f32 0.0, %v1056
  %1058 = vdwg.mxu0
  %1059 = vmatpush.msra.mxu0 0.0
  %1060 = vmatpush.msra.mxu0 0.0
  %1061 = vmatpush.msra.mxu0 0.0
  %1062 = vmatpush.msra.mxu0 0.0
  %1063 = vmatpush.msra.mxu0 %v1017
  %1064 = vmatpush.msra.mxu0 %v1016
  %1065 = vmatpush.msra.mxu0 %v1015
  %1066 = vmatpush.msra.mxu0 %v1014
  %1067 = vmatpush.msra.mxu0 %v1013
  %1068 = vmatpush.msra.mxu0 %v1012
  %1069 = vmatpush.msra.mxu0 %v1011
  %1070 = vmatpush.msra.mxu0 %v1010
  %1071 = vmatpush.msra.mxu0 %v1009
  %1072 = vmatpush.msra.mxu0 %v1008
  %1073 = vmatpush.msra.mxu0 %v1007
  %1074 = vmatpush.msra.mxu0 %v1006
  %1075 = vmatmul.f32.gmra.mxu0 %v894
  %v1076 = vpop.f32.mrf.mxu0
  %v1077 = vadd.f32 %v1039, %v1076
  %1078 = vmatmul.f32.gmra.mxu0 %v897
  %v1079 = vpop.f32.mrf.mxu0
  %v1080 = vadd.f32 %v1042, %v1079
  %1081 = vmatmul.f32.gmra.mxu0 %v900
  %v1082 = vpop.f32.mrf.mxu0
  %v1083 = vadd.f32 %v1045, %v1082
  %1084 = vmatmul.f32.gmra.mxu0 %v903
  %v1085 = vpop.f32.mrf.mxu0
  %v1086 = vadd.f32 %v1048, %v1085
  %1087 = vmatmul.f32.gmra.mxu0 %v906
  %v1088 = vpop.f32.mrf.mxu0
  %v1089 = vadd.f32 %v1051, %v1088
  %1090 = vmatmul.f32.gmra.mxu0 %v909
  %v1091 = vpop.f32.mrf.mxu0
  %v1092 = vadd.f32 %v1054, %v1091
  %1093 = vmatmul.f32.gmra.mxu0 %v1019
  %v1094 = vpop.f32.mrf.mxu0
  %v1095 = vadd.f32 %v1057, %v1094
  %1096 = vdwg.mxu0
  %v1097 = vadd.f32 %v967, %v1077
  %v1098 = vadd.f32 %v970, %v1080
  %v1099 = vadd.f32 %v973, %v1083
  %v1100 = vadd.f32 %v976, %v1086
  %v1101 = vadd.f32 %v979, %v1089
  %v1102 = vadd.f32 %v982, %v1092
  %v1103 = vadd.f32 %v985, %v1095
  %v1104 = vld [vmem:[%s4] sm:$0x1]
  %v1106 = vperm.slane %v1104, 0
  %v1108 = vadd.f32 %v1097, %v1106
  %v1109 = vadd.f32 %v1098, %v1106
  %v1110 = vadd.f32 %v1099, %v1106
  %v1111 = vadd.f32 %v1100, %v1106
  %v1112 = vadd.f32 %v1101, %v1106
  %v1113 = vadd.f32 %v1102, %v1106
  %v1114 = vadd.f32 %v1103, %v1106
  %v1115 = vmax.f32 %v1108, 0.0
  %v1116 = vmax.f32 %v1109, 0.0
  %v1117 = vmax.f32 %v1110, 0.0
  %v1118 = vmax.f32 %v1111, 0.0
  %v1119 = vmax.f32 %v1112, 0.0
  %v1120 = vmax.f32 %v1113, 0.0
  %v1121 = vmax.f32 %v1114, 0.0
  %vm1122 = vcmask 916480
  %1123 = vst.msk [vmem:[#allocation3] sm:$0xff] %vm1122, 0.0
  %s1124 = scalar_lea.vmem [#allocation3], 64
  %1125 = vst.msk [vmem:[%s1124] sm:$0xff] %vm1122, 0.0
  %s1126 = scalar_lea.vmem [#allocation3], 8
  %1127 = vst.msk [vmem:[%s1126] sm:$0xff] %vm1122, %v1115
  %s1128 = scalar_lea.vmem [#allocation3], 16
  %1129 = vst.msk [vmem:[%s1128] sm:$0xff] %vm1122, %v1116
  %s1130 = scalar_lea.vmem [#allocation3], 24
  %1131 = vst.msk [vmem:[%s1130] sm:$0xff] %vm1122, %v1117
  %s1132 = scalar_lea.vmem [#allocation3], 32
  %1133 = vst.msk [vmem:[%s1132] sm:$0xff] %vm1122, %v1118
  %s1134 = scalar_lea.vmem [#allocation3], 40
  %1135 = vst.msk [vmem:[%s1134] sm:$0xff] %vm1122, %v1119
  %s1136 = scalar_lea.vmem [#allocation3], 48
  %1137 = vst.msk [vmem:[%s1136] sm:$0xff] %vm1122, %v1120
  %s1138 = scalar_lea.vmem [#allocation3], 56
  %1139 = vst.msk [vmem:[%s1138] sm:$0xff] %vm1122, %v1121
  %v1140 = vld [vmem:[#allocation3] sm:$0xff]
  %v1141 = vld [vmem:[%s1128] sm:$0xff]
  %v1142 = vld [vmem:[%s1132] sm:$0xff]
  %v1143 = vld [vmem:[%s1136] sm:$0xff]
  %v1144 = vld [vmem:[%s5] sm:$0xff]
  %v1145 = vld [vmem:[%s5 + $0x8] sm:$0xff]
  %v1146 = vld [vmem:[%s5 + $0x10] sm:$0xff]
  %v1147 = vld [vmem:[%s5 + $0x18] sm:$0xff]
  %v1148 = vld [vmem:[%s5 + $0x20] sm:$0xff]
  %v1149 = vld [vmem:[%s5 + $0x28] sm:$0xff]
  %v1150 = vld [vmem:[%s5 + $0x30] sm:$0xff]
  %v1151 = vld [vmem:[%s5 + $0x38] sm:$0xff]
  %v1152 = vld [vmem:[%s5 + $0x40] sm:$0xff]
  %v1153 = vld [vmem:[%s5 + $0x48] sm:$0xff]
  %v1154 = vld [vmem:[%s5 + $0x50] sm:$0xff]
  %v1155 = vld [vmem:[%s5 + $0x58] sm:$0xff]
  %v1156 = vld [vmem:[%s5 + $0x60] sm:$0xff]
  %v1157 = vld [vmem:[%s5 + $0x68] sm:$0xff]
  %v1158 = vld [vmem:[%s1126] sm:$0xff]
  %v1159 = vld [vmem:[%s1130] sm:$0xff]
  %v1160 = vld [vmem:[%s1134] sm:$0xff]
  %v1161 = vld [vmem:[%s1138] sm:$0xff]
  %s1162 = scalar_lea.vmem %s5, 112
  %v1163 = vld [vmem:[%s1162] sm:$0xff]
  %v1164 = vld [vmem:[%s1162 + $0x8] sm:$0xff]
  %v1165 = vld [vmem:[%s1162 + $0x10] sm:$0xff]
  %v1166 = vld [vmem:[%s1162 + $0x18] sm:$0xff]
  %v1167 = vld [vmem:[%s1162 + $0x20] sm:$0xff]
  %v1168 = vld [vmem:[%s1162 + $0x28] sm:$0xff]
  %v1169 = vld [vmem:[%s1162 + $0x30] sm:$0xff]
  %v1170 = vld [vmem:[%s1162 + $0x38] sm:$0xff]
  %v1171 = vld [vmem:[%s1162 + $0x40] sm:$0xff]
  %v1172 = vld [vmem:[%s1162 + $0x48] sm:$0xff]
  %v1173 = vld [vmem:[%s1162 + $0x50] sm:$0xff]
  %v1174 = vld [vmem:[%s1162 + $0x58] sm:$0xff]
  %v1175 = vld [vmem:[%s1162 + $0x60] sm:$0xff]
  %v1176 = vld [vmem:[%s1162 + $0x68] sm:$0xff]
  %v1178 = vsel %vm1122, %v1158, 0
  %v1181 = vsel %vm1122, %v1159, 0
  %v1184 = vsel %vm1122, %v1160, 0
  %v1187 = vsel %vm1122, %v1161, 0
  %1189 = vmatpush.msra.mxu0 0.0
  %1190 = vmatpush.msra.mxu0 0.0
  %1191 = vmatpush.msra.mxu0 %v1176
  %1192 = vmatpush.msra.mxu0 %v1175
  %1193 = vmatpush.msra.mxu0 %v1174
  %1194 = vmatpush.msra.mxu0 %v1173
  %1195 = vmatpush.msra.mxu0 %v1172
  %1196 = vmatpush.msra.mxu0 %v1171
  %1197 = vmatpush.msra.mxu0 %v1170
  %1198 = vmatpush.msra.mxu0 %v1169
  %1199 = vmatpush.msra.mxu0 %v1168
  %1200 = vmatpush.msra.mxu0 %v1167
  %1201 = vmatpush.msra.mxu0 %v1166
  %1202 = vmatpush.msra.mxu0 %v1165
  %1203 = vmatpush.msra.mxu0 %v1164
  %1204 = vmatpush.msra.mxu0 %v1163
  %1205 = vmatmul.f32.gmra.mxu0 %v1178
  %v1206 = vpop.f32.mrf.mxu0
  %v1207 = vadd.f32 0.0, %v1206
  %1208 = vmatmul.f32.gmra.mxu0 %v1181
  %v1209 = vpop.f32.mrf.mxu0
  %v1210 = vadd.f32 0.0, %v1209
  %1211 = vmatmul.f32.gmra.mxu0 %v1184
  %v1212 = vpop.f32.mrf.mxu0
  %v1213 = vadd.f32 0.0, %v1212
  %1214 = vmatmul.f32.gmra.mxu0 %v1187
  %v1215 = vpop.f32.mrf.mxu0
  %v1216 = vadd.f32 0.0, %v1215
  %1217 = vdwg.mxu0
  %v1219 = vsel %vm1122, %v1140, 0
  %v1222 = vsel %vm1122, %v1141, 0
  %v1225 = vsel %vm1122, %v1142, 0
  %v1228 = vsel %vm1122, %v1143, 0
  %1230 = vmatpush.msra.mxu0 0.0
  %1231 = vmatpush.msra.mxu0 0.0
  %1232 = vmatpush.msra.mxu0 %v1157
  %1233 = vmatpush.msra.mxu0 %v1156
  %1234 = vmatpush.msra.mxu0 %v1155
  %1235 = vmatpush.msra.mxu0 %v1154
  %1236 = vmatpush.msra.mxu0 %v1153
  %1237 = vmatpush.msra.mxu0 %v1152
  %1238 = vmatpush.msra.mxu0 %v1151
  %1239 = vmatpush.msra.mxu0 %v1150
  %1240 = vmatpush.msra.mxu0 %v1149
  %1241 = vmatpush.msra.mxu0 %v1148
  %1242 = vmatpush.msra.mxu0 %v1147
  %1243 = vmatpush.msra.mxu0 %v1146
  %1244 = vmatpush.msra.mxu0 %v1145
  %1245 = vmatpush.msra.mxu0 %v1144
  %1246 = vmatmul.f32.gmra.mxu0 %v1219
  %v1247 = vpop.f32.mrf.mxu0
  %v1248 = vadd.f32 %v1207, %v1247
  %1249 = vmatmul.f32.gmra.mxu0 %v1222
  %v1250 = vpop.f32.mrf.mxu0
  %v1251 = vadd.f32 %v1210, %v1250
  %1252 = vmatmul.f32.gmra.mxu0 %v1225
  %v1253 = vpop.f32.mrf.mxu0
  %v1254 = vadd.f32 %v1213, %v1253
  %1255 = vmatmul.f32.gmra.mxu0 %v1228
  %v1256 = vpop.f32.mrf.mxu0
  %v1257 = vadd.f32 %v1216, %v1256
  %1258 = vdwg.mxu0
  %v1259 = vld [vmem:[%s1124] sm:$0xff]
  %s1260 = scalar_lea.vmem %s5, 224
  %v1261 = vld [vmem:[%s1260] sm:$0xff]
  %v1262 = vld [vmem:[%s1260 + $0x8] sm:$0xff]
  %v1263 = vld [vmem:[%s1260 + $0x10] sm:$0xff]
  %v1264 = vld [vmem:[%s1260 + $0x18] sm:$0xff]
  %v1265 = vld [vmem:[%s1260 + $0x20] sm:$0xff]
  %v1266 = vld [vmem:[%s1260 + $0x28] sm:$0xff]
  %v1267 = vld [vmem:[%s1260 + $0x30] sm:$0xff]
  %v1268 = vld [vmem:[%s1260 + $0x38] sm:$0xff]
  %v1269 = vld [vmem:[%s1260 + $0x40] sm:$0xff]
  %v1270 = vld [vmem:[%s1260 + $0x48] sm:$0xff]
  %v1271 = vld [vmem:[%s1260 + $0x50] sm:$0xff]
  %v1272 = vld [vmem:[%s1260 + $0x58] sm:$0xff]
  %v1273 = vld [vmem:[%s1260 + $0x60] sm:$0xff]
  %v1274 = vld [vmem:[%s1260 + $0x68] sm:$0xff]
  %v1276 = vsel %vm1122, %v1259, 0
  %1278 = vmatpush.msra.mxu0 0.0
  %1279 = vmatpush.msra.mxu0 0.0
  %1280 = vmatpush.msra.mxu0 %v1274
  %1281 = vmatpush.msra.mxu0 %v1273
  %1282 = vmatpush.msra.mxu0 %v1272
  %1283 = vmatpush.msra.mxu0 %v1271
  %1284 = vmatpush.msra.mxu0 %v1270
  %1285 = vmatpush.msra.mxu0 %v1269
  %1286 = vmatpush.msra.mxu0 %v1268
  %1287 = vmatpush.msra.mxu0 %v1267
  %1288 = vmatpush.msra.mxu0 %v1266
  %1289 = vmatpush.msra.mxu0 %v1265
  %1290 = vmatpush.msra.mxu0 %v1264
  %1291 = vmatpush.msra.mxu0 %v1263
  %1292 = vmatpush.msra.mxu0 %v1262
  %1293 = vmatpush.msra.mxu0 %v1261
  %1294 = vmatmul.f32.gmra.mxu0 %v1222
  %v1295 = vpop.f32.mrf.mxu0
  %v1296 = vadd.f32 0.0, %v1295
  %1297 = vmatmul.f32.gmra.mxu0 %v1225
  %v1298 = vpop.f32.mrf.mxu0
  %v1299 = vadd.f32 0.0, %v1298
  %1300 = vmatmul.f32.gmra.mxu0 %v1228
  %v1301 = vpop.f32.mrf.mxu0
  %v1302 = vadd.f32 0.0, %v1301
  %1303 = vmatmul.f32.gmra.mxu0 %v1276
  %v1304 = vpop.f32.mrf.mxu0
  %v1305 = vadd.f32 0.0, %v1304
  %1306 = vdwg.mxu0
  %v1307 = vadd.f32 %v1248, %v1296
  %v1308 = vadd.f32 %v1251, %v1299
  %v1309 = vadd.f32 %v1254, %v1302
  %v1310 = vadd.f32 %v1257, %v1305
  %v1311 = vld [vmem:[%s6] sm:$0x1]
  %v1313 = vperm.slane %v1311, 0
  %v1315 = vadd.f32 %v1307, %v1313
  %v1316 = vadd.f32 %v1308, %v1313
  %v1317 = vadd.f32 %v1309, %v1313
  %v1318 = vadd.f32 %v1310, %v1313
  %v1319 = vmax.f32 %v1315, 0.0
  %v1320 = vmax.f32 %v1316, 0.0
  %v1321 = vmax.f32 %v1317, 0.0
  %v1322 = vmax.f32 %v1318, 0.0
  %v1323 = vadd.f32 %v1319, %v1320
  %v1324 = vadd.f32 %v1323, %v1321
  %v1325 = vadd.f32 %v1324, %v1322
  %v1326 = vld [vmem:[%s7] sm:$0xff]
  %v1327 = vld [vmem:[%s7 + $0x8] sm:$0xff]
  %v1328 = vld [vmem:[%s7 + $0x10] sm:$0xff]
  %v1329 = vld [vmem:[%s7 + $0x18] sm:$0xff]
  %v1330 = vld [vmem:[%s7 + $0x20] sm:$0xff]
  %vm1331 = vcmask 326656
  %v1333 = vsel %vm1331, %v1325, 0
  %1335 = vmatpush.msra.mxu0 0.0
  %1336 = vmatpush.msra.mxu0 0.0
  %1337 = vmatpush.msra.mxu0 0.0
  %1338 = vmatpush.msra.mxu0 0.0
  %1339 = vmatpush.msra.mxu0 0.0
  %1340 = vmatpush.msra.mxu0 0.0
  %1341 = vmatpush.msra.mxu0 0.0
  %1342 = vmatpush.msra.mxu0 0.0
  %1343 = vmatpush.msra.mxu0 0.0
  %1344 = vmatpush.msra.mxu0 0.0
  %1345 = vmatpush.msra.mxu0 0.0
  %1346 = vmatpush.msra.mxu0 %v1330
  %1347 = vmatpush.msra.mxu0 %v1329
  %1348 = vmatpush.msra.mxu0 %v1328
  %1349 = vmatpush.msra.mxu0 %v1327
  %1350 = vmatpush.msra.mxu0 %v1326
  %1351 = vmatmul.f32.gmra.mxu0 %v1333
  %v1352 = vpop.f32.mrf.mxu0
  %v1353 = vadd.f32 0.0, %v1352
  %1354 = vdwg.mxu0
  %vm1355 = vcmask 80896
  %1356 = vst.msk [vmem:[%s8] sm:$0xff] %vm1355, %v1353
  // Predicated region
  $region34: #{mnist_cnn_forward.1} parent=0 // pred_check
    _
  $region35: #{mnist_cnn_forward.1} parent=0 // pred_check_branch
    %1358 = sbr.rel (0) target = $region37
  $region36: #{mnist_cnn_forward.1} parent=0 // pred_region
    _
  $region37: #{mnist_cnn_forward.1} parent=0 // pred_fallthru
    _
  // Predicated region
  $region38: #{mnist_cnn_forward.1} parent=0 // pred_check
    _
  $region39: #{mnist_cnn_forward.1} parent=0 // pred_check_branch
    %1360 = sbr.rel (0) target = $region41
  $region40: #{mnist_cnn_forward.1} parent=0 // pred_region
    _
  $region41: #{mnist_cnn_forward.1} parent=0 // pred_fallthru
    _

</llo_original>
